<compile_context>
chip_gen: v5e
topology: v5e:2x2
jax: 0.10.0
libtpu: 0.0.40
codegen_flags: <defaults>
</compile_context>

<pallas_src>
import jax
import jax.numpy as jnp
from jax.experimental import pallas as pl
from jax.experimental.pallas import tpu as pltpu

# ----- "config" (deterministic, synthetic) -----
HIDDEN_SIZE = 32
EMBEDDING_DIM = 16
INIT_UNIFORM_MAG = 0.08
INIT_NORMAL_STD = 0.1


def _bi_gru_kernel(emb_ref, lens_ref,
                   wi_f_ref, wh_f_ref, bi_f_ref, bhn_f_ref,
                   wi_b_ref, wh_b_ref, bi_b_ref, bhn_b_ref,
                   out_ref, hid_ref):
    T, B, H = out_ref.shape
    lens = lens_ref[...]                       # [B, 1] int32

    # ---- hoisted input projection (off the serial critical path) ----
    x = emb_ref[...]                           # [T*B, E]
    gx_f = jnp.dot(x, wi_f_ref[...], preferred_element_type=jnp.float32) + bi_f_ref[...]
    gx_b = jnp.dot(x, wi_b_ref[...], preferred_element_type=jnp.float32) + bi_b_ref[...]

    wh_f = wh_f_ref[...]                       # [H, 3H]
    wh_b = wh_b_ref[...]
    bhn_f = bhn_f_ref[...]                     # [1, H]
    bhn_b = bhn_b_ref[...]

    def cell(gx, h, wh, bhn):
        # single gate-fused recurrent matmul: [B, H] @ [H, 3H]
        gh = jnp.dot(h, wh, preferred_element_type=jnp.float32)
        r = jax.nn.sigmoid(gx[:, 0:H] + gh[:, 0:H])
        z = jax.nn.sigmoid(gx[:, H:2 * H] + gh[:, H:2 * H])
        n = jnp.tanh(gx[:, 2 * H:3 * H] + r * (gh[:, 2 * H:3 * H] + bhn))
        return (1.0 - z) * n + z * h

    h_f = jnp.zeros((B, H), jnp.float32)
    h_b = jnp.zeros((B, H), jnp.float32)
    outs_f = [None] * T
    outs_b = [None] * T

    # Fully unrolled time loop (T static, small). Step s runs the forward
    # chain at t=s and the backward chain at t=T-1-s: two independent
    # dependency chains interleaved for ILP.
    for s in range(T):
        tf = s
        tb = T - 1 - s
        hn_f = cell(gx_f[tf * B:(tf + 1) * B, :], h_f, wh_f, bhn_f)
        hn_b = cell(gx_b[tb * B:(tb + 1) * B, :], h_b, wh_b, bhn_b)
        vf = tf < lens                         # [B, 1] bool
        vb = tb < lens
        h_f = jnp.where(vf, hn_f, h_f)         # freeze state past sequence end
        h_b = jnp.where(vb, hn_b, h_b)
        outs_f[tf] = jnp.where(vf, hn_f, 0.0)  # zero-pad outputs (pad_packed)
        outs_b[tb] = jnp.where(vb, hn_b, 0.0)

    # Epilogue: fused fwd+bwd sum with one clean store per timestep
    # (no per-step read-modify-write of out_ref inside the recurrence).
    for t in range(T):
        out_ref[t] = outs_f[t] + outs_b[t]
    hid_ref[0] = h_f
    hid_ref[1] = h_b


@jax.jit
def encoder_forward(params, inputs, seq_lens):
    """inputs: [T, B] int32; seq_lens: [B] -> (outputs [T,B,H], hidden [2,B,H])."""
    T, B = inputs.shape
    H = HIDDEN_SIZE
    # TODO(synk): embedding gather stays in the XLA wrapper; an in-kernel
    # version would need a manual DMA gather over the vocab table.
    emb = jnp.take(params["embedding"], inputs.reshape(-1), axis=0).astype(jnp.float32)  # [T*B, E]
    lens2d = seq_lens.astype(jnp.int32).reshape(B, 1)

    def fold_bias(b_ih, b_hh):
        # r/z input+hidden biases can be pre-summed into the hoisted
        # projection; b_hh[n] must stay inside r*(...).
        comb = jnp.concatenate([b_ih[:2 * H] + b_hh[:2 * H], b_ih[2 * H:]]).reshape(1, 3 * H)
        bhn = b_hh[2 * H:].reshape(1, H)
        return comb, bhn

    bc_f, bhn_f = fold_bias(params["bih_f"], params["bhh_f"])
    bc_b, bhn_b = fold_bias(params["bih_b"], params["bhh_b"])

    vmem = pl.BlockSpec(memory_space=pltpu.MemorySpace.VMEM)
    outputs, hidden = pl.pallas_call(
        _bi_gru_kernel,
        out_shape=(jax.ShapeDtypeStruct((T, B, H), jnp.float32),
                   jax.ShapeDtypeStruct((2, B, H), jnp.float32)),
        in_specs=[vmem] * 10,
        out_specs=(vmem, vmem),
    )(emb, lens2d,
      params["wi_f"], params["wh_f"], bc_f, bhn_f,
      params["wi_b"], params["wh_b"], bc_b, bhn_b)
    return outputs, hidden


def init_params(vocab_size, key):
    H, E = HIDDEN_SIZE, EMBEDDING_DIM
    k_emb, k_f, k_b = jax.random.split(key, 3)
    # init_wt_normal
    embedding = jax.random.normal(k_emb, (vocab_size, E), jnp.float32) * INIT_NORMAL_STD

    def gru_dir(k):
        k1, k2 = jax.random.split(k)
        # init_rnn_wt: weights uniform(-mag, mag); PyTorch gate order (r, z, n)
        w_ih = jax.random.uniform(k1, (3 * H, E), jnp.float32,
                                  -INIT_UNIFORM_MAG, INIT_UNIFORM_MAG)
        w_hh = jax.random.uniform(k2, (3 * H, H), jnp.float32,
                                  -INIT_UNIFORM_MAG, INIT_UNIFORM_MAG)
        # init_rnn_wt: biases zero, ones in [n//4, n//2)
        n = 3 * H
        b = jnp.zeros((n,), jnp.float32).at[n // 4:n // 2].set(1.0)
        wi = w_ih.T    # [E, 3H], gate-fused columns r|z|n
        wh = w_hh.T    # [H, 3H]
        return wi, wh, b, b   # b_ih, b_hh

    wi_f, wh_f, bih_f, bhh_f = gru_dir(k_f)
    wi_b, wh_b, bih_b, bhh_b = gru_dir(k_b)
    return dict(embedding=embedding,
                wi_f=wi_f, wh_f=wh_f, bih_f=bih_f, bhh_f=bhh_f,
                wi_b=wi_b, wh_b=wh_b, bih_b=bih_b, bhh_b=bhh_b)


def reference_forward(params, inputs, seq_lens):
    """Pure-JAX reference with PyTorch packed-bi-GRU semantics (unfused gates)."""
    T, B = inputs.shape
    H = HIDDEN_SIZE
    emb = jnp.take(params["embedding"], inputs, axis=0).astype(jnp.float32)  # [T,B,E]
    lens = seq_lens.astype(jnp.int32)

    def run_dir(wi, wh, bih, bhh, reverse):
        wi_r, wi_z, wi_n = wi[:, :H], wi[:, H:2 * H], wi[:, 2 * H:]
        wh_r, wh_z, wh_n = wh[:, :H], wh[:, H:2 * H], wh[:, 2 * H:]
        bi_r, bi_z, bi_n = bih[:H], bih[H:2 * H], bih[2 * H:]
        bh_r, bh_z, bh_n = bhh[:H], bhh[H:2 * H], bhh[2 * H:]
        h = jnp.zeros((B, H), jnp.float32)
        outs = [None] * T
        trange = range(T - 1, -1, -1) if reverse else range(T)
        for t in trange:
            x = emb[t]
            r = jax.nn.sigmoid(x @ wi_r + bi_r + h @ wh_r + bh_r)
            z = jax.nn.sigmoid(x @ wi_z + bi_z + h @ wh_z + bh_z)
            n = jnp.tanh(x @ wi_n + bi_n + r * (h @ wh_n + bh_n))
            hn = (1.0 - z) * n + z * h
            valid = (t < lens)[:, None]
            h = jnp.where(valid, hn, h)
            outs[t] = jnp.where(valid, hn, 0.0)
        return jnp.stack(outs), h

    out_f, hid_f = run_dir(params["wi_f"], params["wh_f"], params["bih_f"], params["bhh_f"], False)
    out_b, hid_b = run_dir(params["wi_b"], params["wh_b"], params["bih_b"], params["bhh_b"], True)
    return out_f + out_b, jnp.stack([hid_f, hid_b])


if __name__ == "__main__":
    key = jax.random.PRNGKey(0)
    k_param, k_tok = jax.random.split(key)

    VOCAB = 50
    T, B = 8, 4
    params = init_params(VOCAB, k_param)

    inputs = jax.random.randint(k_tok, (T, B), 0, VOCAB, dtype=jnp.int32)  # [T, B]
    seq_lens = jnp.array([8, 6, 5, 3], dtype=jnp.int32)                    # descending lengths

    outputs, hidden = encoder_forward(params, inputs, seq_lens)
    jax.block_until_ready((outputs, hidden))

    ref_out, ref_hid = reference_forward(params, inputs, seq_lens)
    assert outputs.shape == (T, B, HIDDEN_SIZE)
    assert hidden.shape == (2, B, HIDDEN_SIZE)
    assert jnp.allclose(outputs, ref_out, atol=1e-5, rtol=1e-5)
    assert jnp.allclose(hidden, ref_hid, atol=1e-5, rtol=1e-5)

    print("KERNEL_OK")
</pallas_src>

<mosaic_0001>
module attributes {stable_mosaic.version = 11 : i64} {
  func.func @_bi_gru_kernel(%arg0: memref<32x16xf32, #tpu.memory_space<vmem>>, %arg1: memref<4x1xi32, #tpu.memory_space<vmem>>, %arg2: memref<16x96xf32, #tpu.memory_space<vmem>>, %arg3: memref<32x96xf32, #tpu.memory_space<vmem>>, %arg4: memref<1x96xf32, #tpu.memory_space<vmem>>, %arg5: memref<1x32xf32, #tpu.memory_space<vmem>>, %arg6: memref<16x96xf32, #tpu.memory_space<vmem>>, %arg7: memref<32x96xf32, #tpu.memory_space<vmem>>, %arg8: memref<1x96xf32, #tpu.memory_space<vmem>>, %arg9: memref<1x32xf32, #tpu.memory_space<vmem>>, %arg10: memref<8x4x32xf32, #tpu.memory_space<vmem>>, %arg11: memref<2x4x32xf32, #tpu.memory_space<vmem>>) attributes {dimension_semantics = [], scalar_prefetch = 0 : i64, scratch_operands = 0 : i64, tpu.core_type = #tpu.core_type<tc>} {
    %c0 = arith.constant 0 : index
    %c0_0 = arith.constant 0 : index
    %0 = vector.load %arg1[%c0, %c0_0] : memref<4x1xi32, #tpu.memory_space<vmem>>, vector<4x1xi32>
    %c0_1 = arith.constant 0 : index
    %c0_2 = arith.constant 0 : index
    %1 = vector.load %arg0[%c0_1, %c0_2] : memref<32x16xf32, #tpu.memory_space<vmem>>, vector<32x16xf32>
    %c0_3 = arith.constant 0 : index
    %c0_4 = arith.constant 0 : index
    %2 = vector.load %arg2[%c0_3, %c0_4] : memref<16x96xf32, #tpu.memory_space<vmem>>, vector<16x96xf32>
    %cst = arith.constant dense<0.000000e+00> : vector<32x96xf32>
    %3 = tpu.matmul %1, %2, %cst {dimension_numbers = #tpu.dot_dimension_numbers<[1], [0], [0], [1], [0, 0, 1, 1], [], []>} : vector<32x16xf32>, vector<16x96xf32>, vector<32x96xf32> -> vector<32x96xf32>
    %c0_5 = arith.constant 0 : index
    %c0_6 = arith.constant 0 : index
    %4 = vector.load %arg4[%c0_5, %c0_6] : memref<1x96xf32, #tpu.memory_space<vmem>>, vector<1x96xf32>
    %5 = vector.broadcast %4 : vector<1x96xf32> to vector<32x96xf32>
    %6 = arith.addf %3, %5 : vector<32x96xf32>
    %c0_7 = arith.constant 0 : index
    %c0_8 = arith.constant 0 : index
    %7 = vector.load %arg6[%c0_7, %c0_8] : memref<16x96xf32, #tpu.memory_space<vmem>>, vector<16x96xf32>
    %cst_9 = arith.constant dense<0.000000e+00> : vector<32x96xf32>
    %8 = tpu.matmul %1, %7, %cst_9 {dimension_numbers = #tpu.dot_dimension_numbers<[1], [0], [0], [1], [0, 0, 1, 1], [], []>} : vector<32x16xf32>, vector<16x96xf32>, vector<32x96xf32> -> vector<32x96xf32>
    %c0_10 = arith.constant 0 : index
    %c0_11 = arith.constant 0 : index
    %9 = vector.load %arg8[%c0_10, %c0_11] : memref<1x96xf32, #tpu.memory_space<vmem>>, vector<1x96xf32>
    %10 = vector.broadcast %9 : vector<1x96xf32> to vector<32x96xf32>
    %11 = arith.addf %8, %10 : vector<32x96xf32>
    %c0_12 = arith.constant 0 : index
    %c0_13 = arith.constant 0 : index
    %12 = vector.load %arg3[%c0_12, %c0_13] : memref<32x96xf32, #tpu.memory_space<vmem>>, vector<32x96xf32>
    %c0_14 = arith.constant 0 : index
    %c0_15 = arith.constant 0 : index
    %13 = vector.load %arg7[%c0_14, %c0_15] : memref<32x96xf32, #tpu.memory_space<vmem>>, vector<32x96xf32>
    %c0_16 = arith.constant 0 : index
    %c0_17 = arith.constant 0 : index
    %14 = vector.load %arg5[%c0_16, %c0_17] : memref<1x32xf32, #tpu.memory_space<vmem>>, vector<1x32xf32>
    %c0_18 = arith.constant 0 : index
    %c0_19 = arith.constant 0 : index
    %15 = vector.load %arg9[%c0_18, %c0_19] : memref<1x32xf32, #tpu.memory_space<vmem>>, vector<1x32xf32>
    %cst_20 = arith.constant 0.000000e+00 : f32
    %16 = vector.broadcast %cst_20 : f32 to vector<4x32xf32>
    %cst_21 = arith.constant 0.000000e+00 : f32
    %17 = vector.broadcast %cst_21 : f32 to vector<4x32xf32>
    %18 = vector.extract_strided_slice %6 {offsets = [0, 0], sizes = [4, 96], strides = [1, 1]} : vector<32x96xf32> to vector<4x96xf32>
    %cst_22 = arith.constant dense<0.000000e+00> : vector<4x96xf32>
    %19 = tpu.matmul %16, %12, %cst_22 {dimension_numbers = #tpu.dot_dimension_numbers<[1], [0], [0], [1], [0, 0, 1, 1], [], []>} : vector<4x32xf32>, vector<32x96xf32>, vector<4x96xf32> -> vector<4x96xf32>
    %20 = vector.extract_strided_slice %18 {offsets = [0, 0], sizes = [4, 32], strides = [1, 1]} : vector<4x96xf32> to vector<4x32xf32>
    %21 = vector.extract_strided_slice %19 {offsets = [0, 0], sizes = [4, 32], strides = [1, 1]} : vector<4x96xf32> to vector<4x32xf32>
    %22 = arith.addf %20, %21 : vector<4x32xf32>
    %23 = arith.negf %22 : vector<4x32xf32>
    %24 = math.exp %23 : vector<4x32xf32>
    %cst_23 = arith.constant 1.000000e+00 : f32
    %25 = vector.broadcast %cst_23 : f32 to vector<4x32xf32>
    %26 = arith.addf %25, %24 : vector<4x32xf32>
    %27 = arith.divf %25, %26 : vector<4x32xf32>
    %28 = vector.extract_strided_slice %18 {offsets = [0, 32], sizes = [4, 32], strides = [1, 1]} : vector<4x96xf32> to vector<4x32xf32>
    %29 = vector.extract_strided_slice %19 {offsets = [0, 32], sizes = [4, 32], strides = [1, 1]} : vector<4x96xf32> to vector<4x32xf32>
    %30 = arith.addf %28, %29 : vector<4x32xf32>
    %31 = arith.negf %30 : vector<4x32xf32>
    %32 = math.exp %31 : vector<4x32xf32>
    %cst_24 = arith.constant 1.000000e+00 : f32
    %33 = vector.broadcast %cst_24 : f32 to vector<4x32xf32>
    %34 = arith.addf %33, %32 : vector<4x32xf32>
    %35 = arith.divf %33, %34 : vector<4x32xf32>
    %36 = vector.extract_strided_slice %18 {offsets = [0, 64], sizes = [4, 32], strides = [1, 1]} : vector<4x96xf32> to vector<4x32xf32>
    %37 = vector.extract_strided_slice %19 {offsets = [0, 64], sizes = [4, 32], strides = [1, 1]} : vector<4x96xf32> to vector<4x32xf32>
    %38 = vector.broadcast %14 : vector<1x32xf32> to vector<4x32xf32>
    %39 = arith.addf %37, %38 : vector<4x32xf32>
    %40 = arith.mulf %27, %39 : vector<4x32xf32>
    %41 = arith.addf %36, %40 : vector<4x32xf32>
    %42 = math.tanh %41 : vector<4x32xf32>
    %cst_25 = arith.constant 1.000000e+00 : f32
    %43 = vector.broadcast %cst_25 : f32 to vector<4x32xf32>
    %44 = arith.subf %43, %35 : vector<4x32xf32>
    %45 = arith.mulf %44, %42 : vector<4x32xf32>
    %46 = arith.mulf %35, %16 : vector<4x32xf32>
    %47 = arith.addf %45, %46 : vector<4x32xf32>
    %48 = vector.extract_strided_slice %11 {offsets = [28, 0], sizes = [4, 96], strides = [1, 1]} : vector<32x96xf32> to vector<4x96xf32>
    %cst_26 = arith.constant dense<0.000000e+00> : vector<4x96xf32>
    %49 = tpu.matmul %17, %13, %cst_26 {dimension_numbers = #tpu.dot_dimension_numbers<[1], [0], [0], [1], [0, 0, 1, 1], [], []>} : vector<4x32xf32>, vector<32x96xf32>, vector<4x96xf32> -> vector<4x96xf32>
    %50 = vector.extract_strided_slice %48 {offsets = [0, 0], sizes = [4, 32], strides = [1, 1]} : vector<4x96xf32> to vector<4x32xf32>
    %51 = vector.extract_strided_slice %49 {offsets = [0, 0], sizes = [4, 32], strides = [1, 1]} : vector<4x96xf32> to vector<4x32xf32>
    %52 = arith.addf %50, %51 : vector<4x32xf32>
    %53 = arith.negf %52 : vector<4x32xf32>
    %54 = math.exp %53 : vector<4x32xf32>
    %cst_27 = arith.constant 1.000000e+00 : f32
    %55 = vector.broadcast %cst_27 : f32 to vector<4x32xf32>
    %56 = arith.addf %55, %54 : vector<4x32xf32>
    %57 = arith.divf %55, %56 : vector<4x32xf32>
    %58 = vector.extract_strided_slice %48 {offsets = [0, 32], sizes = [4, 32], strides = [1, 1]} : vector<4x96xf32> to vector<4x32xf32>
    %59 = vector.extract_strided_slice %49 {offsets = [0, 32], sizes = [4, 32], strides = [1, 1]} : vector<4x96xf32> to vector<4x32xf32>
    %60 = arith.addf %58, %59 : vector<4x32xf32>
    %61 = arith.negf %60 : vector<4x32xf32>
    %62 = math.exp %61 : vector<4x32xf32>
    %cst_28 = arith.constant 1.000000e+00 : f32
    %63 = vector.broadcast %cst_28 : f32 to vector<4x32xf32>
    %64 = arith.addf %63, %62 : vector<4x32xf32>
    %65 = arith.divf %63, %64 : vector<4x32xf32>
    %66 = vector.extract_strided_slice %48 {offsets = [0, 64], sizes = [4, 32], strides = [1, 1]} : vector<4x96xf32> to vector<4x32xf32>
    %67 = vector.extract_strided_slice %49 {offsets = [0, 64], sizes = [4, 32], strides = [1, 1]} : vector<4x96xf32> to vector<4x32xf32>
    %68 = vector.broadcast %15 : vector<1x32xf32> to vector<4x32xf32>
    %69 = arith.addf %67, %68 : vector<4x32xf32>
    %70 = arith.mulf %57, %69 : vector<4x32xf32>
    %71 = arith.addf %66, %70 : vector<4x32xf32>
    %72 = math.tanh %71 : vector<4x32xf32>
    %cst_29 = arith.constant 1.000000e+00 : f32
    %73 = vector.broadcast %cst_29 : f32 to vector<4x32xf32>
    %74 = arith.subf %73, %65 : vector<4x32xf32>
    %75 = arith.mulf %74, %72 : vector<4x32xf32>
    %76 = arith.mulf %65, %17 : vector<4x32xf32>
    %77 = arith.addf %75, %76 : vector<4x32xf32>
    %c0_i32 = arith.constant 0 : i32
    %78 = vector.broadcast %c0_i32 : i32 to vector<4x1xi32>
    %79 = arith.cmpi sgt, %0, %78 : vector<4x1xi32>
    %c7_i32 = arith.constant 7 : i32
    %80 = vector.broadcast %c7_i32 : i32 to vector<4x1xi32>
    %81 = arith.cmpi sgt, %0, %80 : vector<4x1xi32>
    %82 = vector.shape_cast %79 : vector<4x1xi1> to vector<4x1xi1>
    %83 = vector.broadcast %82 : vector<4x1xi1> to vector<4x32xi1>
    %84 = arith.select %83, %47, %16 : vector<4x32xi1>, vector<4x32xf32>
    %85 = vector.shape_cast %81 : vector<4x1xi1> to vector<4x1xi1>
    %86 = vector.broadcast %85 : vector<4x1xi1> to vector<4x32xi1>
    %87 = arith.select %86, %77, %17 : vector<4x32xi1>, vector<4x32xf32>
    %cst_30 = arith.constant 0.000000e+00 : f32
    %88 = vector.shape_cast %79 : vector<4x1xi1> to vector<4x1xi1>
    %89 = vector.broadcast %88 : vector<4x1xi1> to vector<4x32xi1>
    %90 = vector.broadcast %cst_30 : f32 to vector<4x32xf32>
    %91 = arith.select %89, %47, %90 : vector<4x32xi1>, vector<4x32xf32>
    %cst_31 = arith.constant 0.000000e+00 : f32
    %92 = vector.shape_cast %81 : vector<4x1xi1> to vector<4x1xi1>
    %93 = vector.broadcast %92 : vector<4x1xi1> to vector<4x32xi1>
    %94 = vector.broadcast %cst_31 : f32 to vector<4x32xf32>
    %95 = arith.select %93, %77, %94 : vector<4x32xi1>, vector<4x32xf32>
    %96 = vector.extract_strided_slice %6 {offsets = [4, 0], sizes = [4, 96], strides = [1, 1]} : vector<32x96xf32> to vector<4x96xf32>
    %cst_32 = arith.constant dense<0.000000e+00> : vector<4x96xf32>
    %97 = tpu.matmul %84, %12, %cst_32 {dimension_numbers = #tpu.dot_dimension_numbers<[1], [0], [0], [1], [0, 0, 1, 1], [], []>} : vector<4x32xf32>, vector<32x96xf32>, vector<4x96xf32> -> vector<4x96xf32>
    %98 = vector.extract_strided_slice %96 {offsets = [0, 0], sizes = [4, 32], strides = [1, 1]} : vector<4x96xf32> to vector<4x32xf32>
    %99 = vector.extract_strided_slice %97 {offsets = [0, 0], sizes = [4, 32], strides = [1, 1]} : vector<4x96xf32> to vector<4x32xf32>
    %100 = arith.addf %98, %99 : vector<4x32xf32>
    %101 = arith.negf %100 : vector<4x32xf32>
    %102 = math.exp %101 : vector<4x32xf32>
    %cst_33 = arith.constant 1.000000e+00 : f32
    %103 = vector.broadcast %cst_33 : f32 to vector<4x32xf32>
    %104 = arith.addf %103, %102 : vector<4x32xf32>
    %105 = arith.divf %103, %104 : vector<4x32xf32>
    %106 = vector.extract_strided_slice %96 {offsets = [0, 32], sizes = [4, 32], strides = [1, 1]} : vector<4x96xf32> to vector<4x32xf32>
    %107 = vector.extract_strided_slice %97 {offsets = [0, 32], sizes = [4, 32], strides = [1, 1]} : vector<4x96xf32> to vector<4x32xf32>
    %108 = arith.addf %106, %107 : vector<4x32xf32>
    %109 = arith.negf %108 : vector<4x32xf32>
    %110 = math.exp %109 : vector<4x32xf32>
    %cst_34 = arith.constant 1.000000e+00 : f32
    %111 = vector.broadcast %cst_34 : f32 to vector<4x32xf32>
    %112 = arith.addf %111, %110 : vector<4x32xf32>
    %113 = arith.divf %111, %112 : vector<4x32xf32>
    %114 = vector.extract_strided_slice %96 {offsets = [0, 64], sizes = [4, 32], strides = [1, 1]} : vector<4x96xf32> to vector<4x32xf32>
    %115 = vector.extract_strided_slice %97 {offsets = [0, 64], sizes = [4, 32], strides = [1, 1]} : vector<4x96xf32> to vector<4x32xf32>
    %116 = vector.broadcast %14 : vector<1x32xf32> to vector<4x32xf32>
    %117 = arith.addf %115, %116 : vector<4x32xf32>
    %118 = arith.mulf %105, %117 : vector<4x32xf32>
    %119 = arith.addf %114, %118 : vector<4x32xf32>
    %120 = math.tanh %119 : vector<4x32xf32>
    %cst_35 = arith.constant 1.000000e+00 : f32
    %121 = vector.broadcast %cst_35 : f32 to vector<4x32xf32>
    %122 = arith.subf %121, %113 : vector<4x32xf32>
    %123 = arith.mulf %122, %120 : vector<4x32xf32>
    %124 = arith.mulf %113, %84 : vector<4x32xf32>
    %125 = arith.addf %123, %124 : vector<4x32xf32>
    %126 = vector.extract_strided_slice %11 {offsets = [24, 0], sizes = [4, 96], strides = [1, 1]} : vector<32x96xf32> to vector<4x96xf32>
    %cst_36 = arith.constant dense<0.000000e+00> : vector<4x96xf32>
    %127 = tpu.matmul %87, %13, %cst_36 {dimension_numbers = #tpu.dot_dimension_numbers<[1], [0], [0], [1], [0, 0, 1, 1], [], []>} : vector<4x32xf32>, vector<32x96xf32>, vector<4x96xf32> -> vector<4x96xf32>
    %128 = vector.extract_strided_slice %126 {offsets = [0, 0], sizes = [4, 32], strides = [1, 1]} : vector<4x96xf32> to vector<4x32xf32>
    %129 = vector.extract_strided_slice %127 {offsets = [0, 0], sizes = [4, 32], strides = [1, 1]} : vector<4x96xf32> to vector<4x32xf32>
    %130 = arith.addf %128, %129 : vector<4x32xf32>
    %131 = arith.negf %130 : vector<4x32xf32>
    %132 = math.exp %131 : vector<4x32xf32>
    %cst_37 = arith.constant 1.000000e+00 : f32
    %133 = vector.broadcast %cst_37 : f32 to vector<4x32xf32>
    %134 = arith.addf %133, %132 : vector<4x32xf32>
    %135 = arith.divf %133, %134 : vector<4x32xf32>
    %136 = vector.extract_strided_slice %126 {offsets = [0, 32], sizes = [4, 32], strides = [1, 1]} : vector<4x96xf32> to vector<4x32xf32>
    %137 = vector.extract_strided_slice %127 {offsets = [0, 32], sizes = [4, 32], strides = [1, 1]} : vector<4x96xf32> to vector<4x32xf32>
    %138 = arith.addf %136, %137 : vector<4x32xf32>
    %139 = arith.negf %138 : vector<4x32xf32>
    %140 = math.exp %139 : vector<4x32xf32>
    %cst_38 = arith.constant 1.000000e+00 : f32
    %141 = vector.broadcast %cst_38 : f32 to vector<4x32xf32>
    %142 = arith.addf %141, %140 : vector<4x32xf32>
    %143 = arith.divf %141, %142 : vector<4x32xf32>
    %144 = vector.extract_strided_slice %126 {offsets = [0, 64], sizes = [4, 32], strides = [1, 1]} : vector<4x96xf32> to vector<4x32xf32>
    %145 = vector.extract_strided_slice %127 {offsets = [0, 64], sizes = [4, 32], strides = [1, 1]} : vector<4x96xf32> to vector<4x32xf32>
    %146 = vector.broadcast %15 : vector<1x32xf32> to vector<4x32xf32>
    %147 = arith.addf %145, %146 : vector<4x32xf32>
    %148 = arith.mulf %135, %147 : vector<4x32xf32>
    %149 = arith.addf %144, %148 : vector<4x32xf32>
    %150 = math.tanh %149 : vector<4x32xf32>
    %cst_39 = arith.constant 1.000000e+00 : f32
    %151 = vector.broadcast %cst_39 : f32 to vector<4x32xf32>
    %152 = arith.subf %151, %143 : vector<4x32xf32>
    %153 = arith.mulf %152, %150 : vector<4x32xf32>
    %154 = arith.mulf %143, %87 : vector<4x32xf32>
    %155 = arith.addf %153, %154 : vector<4x32xf32>
    %c1_i32 = arith.constant 1 : i32
    %156 = vector.broadcast %c1_i32 : i32 to vector<4x1xi32>
    %157 = arith.cmpi sgt, %0, %156 : vector<4x1xi32>
    %c6_i32 = arith.constant 6 : i32
    %158 = vector.broadcast %c6_i32 : i32 to vector<4x1xi32>
    %159 = arith.cmpi sgt, %0, %158 : vector<4x1xi32>
    %160 = vector.shape_cast %157 : vector<4x1xi1> to vector<4x1xi1>
    %161 = vector.broadcast %160 : vector<4x1xi1> to vector<4x32xi1>
    %162 = arith.select %161, %125, %84 : vector<4x32xi1>, vector<4x32xf32>
    %163 = vector.shape_cast %159 : vector<4x1xi1> to vector<4x1xi1>
    %164 = vector.broadcast %163 : vector<4x1xi1> to vector<4x32xi1>
    %165 = arith.select %164, %155, %87 : vector<4x32xi1>, vector<4x32xf32>
    %cst_40 = arith.constant 0.000000e+00 : f32
    %166 = vector.shape_cast %157 : vector<4x1xi1> to vector<4x1xi1>
    %167 = vector.broadcast %166 : vector<4x1xi1> to vector<4x32xi1>
    %168 = vector.broadcast %cst_40 : f32 to vector<4x32xf32>
    %169 = arith.select %167, %125, %168 : vector<4x32xi1>, vector<4x32xf32>
    %cst_41 = arith.constant 0.000000e+00 : f32
    %170 = vector.shape_cast %159 : vector<4x1xi1> to vector<4x1xi1>
    %171 = vector.broadcast %170 : vector<4x1xi1> to vector<4x32xi1>
    %172 = vector.broadcast %cst_41 : f32 to vector<4x32xf32>
    %173 = arith.select %171, %155, %172 : vector<4x32xi1>, vector<4x32xf32>
    %174 = vector.extract_strided_slice %6 {offsets = [8, 0], sizes = [4, 96], strides = [1, 1]} : vector<32x96xf32> to vector<4x96xf32>
    %cst_42 = arith.constant dense<0.000000e+00> : vector<4x96xf32>
    %175 = tpu.matmul %162, %12, %cst_42 {dimension_numbers = #tpu.dot_dimension_numbers<[1], [0], [0], [1], [0, 0, 1, 1], [], []>} : vector<4x32xf32>, vector<32x96xf32>, vector<4x96xf32> -> vector<4x96xf32>
    %176 = vector.extract_strided_slice %174 {offsets = [0, 0], sizes = [4, 32], strides = [1, 1]} : vector<4x96xf32> to vector<4x32xf32>
    %177 = vector.extract_strided_slice %175 {offsets = [0, 0], sizes = [4, 32], strides = [1, 1]} : vector<4x96xf32> to vector<4x32xf32>
    %178 = arith.addf %176, %177 : vector<4x32xf32>
    %179 = arith.negf %178 : vector<4x32xf32>
    %180 = math.exp %179 : vector<4x32xf32>
    %cst_43 = arith.constant 1.000000e+00 : f32
    %181 = vector.broadcast %cst_43 : f32 to vector<4x32xf32>
    %182 = arith.addf %181, %180 : vector<4x32xf32>
    %183 = arith.divf %181, %182 : vector<4x32xf32>
    %184 = vector.extract_strided_slice %174 {offsets = [0, 32], sizes = [4, 32], strides = [1, 1]} : vector<4x96xf32> to vector<4x32xf32>
    %185 = vector.extract_strided_slice %175 {offsets = [0, 32], sizes = [4, 32], strides = [1, 1]} : vector<4x96xf32> to vector<4x32xf32>
    %186 = arith.addf %184, %185 : vector<4x32xf32>
    %187 = arith.negf %186 : vector<4x32xf32>
    %188 = math.exp %187 : vector<4x32xf32>
    %cst_44 = arith.constant 1.000000e+00 : f32
    %189 = vector.broadcast %cst_44 : f32 to vector<4x32xf32>
    %190 = arith.addf %189, %188 : vector<4x32xf32>
    %191 = arith.divf %189, %190 : vector<4x32xf32>
    %192 = vector.extract_strided_slice %174 {offsets = [0, 64], sizes = [4, 32], strides = [1, 1]} : vector<4x96xf32> to vector<4x32xf32>
    %193 = vector.extract_strided_slice %175 {offsets = [0, 64], sizes = [4, 32], strides = [1, 1]} : vector<4x96xf32> to vector<4x32xf32>
    %194 = vector.broadcast %14 : vector<1x32xf32> to vector<4x32xf32>
    %195 = arith.addf %193, %194 : vector<4x32xf32>
    %196 = arith.mulf %183, %195 : vector<4x32xf32>
    %197 = arith.addf %192, %196 : vector<4x32xf32>
    %198 = math.tanh %197 : vector<4x32xf32>
    %cst_45 = arith.constant 1.000000e+00 : f32
    %199 = vector.broadcast %cst_45 : f32 to vector<4x32xf32>
    %200 = arith.subf %199, %191 : vector<4x32xf32>
    %201 = arith.mulf %200, %198 : vector<4x32xf32>
    %202 = arith.mulf %191, %162 : vector<4x32xf32>
    %203 = arith.addf %201, %202 : vector<4x32xf32>
    %204 = vector.extract_strided_slice %11 {offsets = [20, 0], sizes = [4, 96], strides = [1, 1]} : vector<32x96xf32> to vector<4x96xf32>
    %cst_46 = arith.constant dense<0.000000e+00> : vector<4x96xf32>
    %205 = tpu.matmul %165, %13, %cst_46 {dimension_numbers = #tpu.dot_dimension_numbers<[1], [0], [0], [1], [0, 0, 1, 1], [], []>} : vector<4x32xf32>, vector<32x96xf32>, vector<4x96xf32> -> vector<4x96xf32>
    %206 = vector.extract_strided_slice %204 {offsets = [0, 0], sizes = [4, 32], strides = [1, 1]} : vector<4x96xf32> to vector<4x32xf32>
    %207 = vector.extract_strided_slice %205 {offsets = [0, 0], sizes = [4, 32], strides = [1, 1]} : vector<4x96xf32> to vector<4x32xf32>
    %208 = arith.addf %206, %207 : vector<4x32xf32>
    %209 = arith.negf %208 : vector<4x32xf32>
    %210 = math.exp %209 : vector<4x32xf32>
    %cst_47 = arith.constant 1.000000e+00 : f32
    %211 = vector.broadcast %cst_47 : f32 to vector<4x32xf32>
    %212 = arith.addf %211, %210 : vector<4x32xf32>
    %213 = arith.divf %211, %212 : vector<4x32xf32>
    %214 = vector.extract_strided_slice %204 {offsets = [0, 32], sizes = [4, 32], strides = [1, 1]} : vector<4x96xf32> to vector<4x32xf32>
    %215 = vector.extract_strided_slice %205 {offsets = [0, 32], sizes = [4, 32], strides = [1, 1]} : vector<4x96xf32> to vector<4x32xf32>
    %216 = arith.addf %214, %215 : vector<4x32xf32>
    %217 = arith.negf %216 : vector<4x32xf32>
    %218 = math.exp %217 : vector<4x32xf32>
    %cst_48 = arith.constant 1.000000e+00 : f32
    %219 = vector.broadcast %cst_48 : f32 to vector<4x32xf32>
    %220 = arith.addf %219, %218 : vector<4x32xf32>
    %221 = arith.divf %219, %220 : vector<4x32xf32>
    %222 = vector.extract_strided_slice %204 {offsets = [0, 64], sizes = [4, 32], strides = [1, 1]} : vector<4x96xf32> to vector<4x32xf32>
    %223 = vector.extract_strided_slice %205 {offsets = [0, 64], sizes = [4, 32], strides = [1, 1]} : vector<4x96xf32> to vector<4x32xf32>
    %224 = vector.broadcast %15 : vector<1x32xf32> to vector<4x32xf32>
    %225 = arith.addf %223, %224 : vector<4x32xf32>
    %226 = arith.mulf %213, %225 : vector<4x32xf32>
    %227 = arith.addf %222, %226 : vector<4x32xf32>
    %228 = math.tanh %227 : vector<4x32xf32>
    %cst_49 = arith.constant 1.000000e+00 : f32
    %229 = vector.broadcast %cst_49 : f32 to vector<4x32xf32>
    %230 = arith.subf %229, %221 : vector<4x32xf32>
    %231 = arith.mulf %230, %228 : vector<4x32xf32>
    %232 = arith.mulf %221, %165 : vector<4x32xf32>
    %233 = arith.addf %231, %232 : vector<4x32xf32>
    %c2_i32 = arith.constant 2 : i32
    %234 = vector.broadcast %c2_i32 : i32 to vector<4x1xi32>
    %235 = arith.cmpi sgt, %0, %234 : vector<4x1xi32>
    %c5_i32 = arith.constant 5 : i32
    %236 = vector.broadcast %c5_i32 : i32 to vector<4x1xi32>
    %237 = arith.cmpi sgt, %0, %236 : vector<4x1xi32>
    %238 = vector.shape_cast %235 : vector<4x1xi1> to vector<4x1xi1>
    %239 = vector.broadcast %238 : vector<4x1xi1> to vector<4x32xi1>
    %240 = arith.select %239, %203, %162 : vector<4x32xi1>, vector<4x32xf32>
    %241 = vector.shape_cast %237 : vector<4x1xi1> to vector<4x1xi1>
    %242 = vector.broadcast %241 : vector<4x1xi1> to vector<4x32xi1>
    %243 = arith.select %242, %233, %165 : vector<4x32xi1>, vector<4x32xf32>
    %cst_50 = arith.constant 0.000000e+00 : f32
    %244 = vector.shape_cast %235 : vector<4x1xi1> to vector<4x1xi1>
    %245 = vector.broadcast %244 : vector<4x1xi1> to vector<4x32xi1>
    %246 = vector.broadcast %cst_50 : f32 to vector<4x32xf32>
    %247 = arith.select %245, %203, %246 : vector<4x32xi1>, vector<4x32xf32>
    %cst_51 = arith.constant 0.000000e+00 : f32
    %248 = vector.shape_cast %237 : vector<4x1xi1> to vector<4x1xi1>
    %249 = vector.broadcast %248 : vector<4x1xi1> to vector<4x32xi1>
    %250 = vector.broadcast %cst_51 : f32 to vector<4x32xf32>
    %251 = arith.select %249, %233, %250 : vector<4x32xi1>, vector<4x32xf32>
    %252 = vector.extract_strided_slice %6 {offsets = [12, 0], sizes = [4, 96], strides = [1, 1]} : vector<32x96xf32> to vector<4x96xf32>
    %cst_52 = arith.constant dense<0.000000e+00> : vector<4x96xf32>
    %253 = tpu.matmul %240, %12, %cst_52 {dimension_numbers = #tpu.dot_dimension_numbers<[1], [0], [0], [1], [0, 0, 1, 1], [], []>} : vector<4x32xf32>, vector<32x96xf32>, vector<4x96xf32> -> vector<4x96xf32>
    %254 = vector.extract_strided_slice %252 {offsets = [0, 0], sizes = [4, 32], strides = [1, 1]} : vector<4x96xf32> to vector<4x32xf32>
    %255 = vector.extract_strided_slice %253 {offsets = [0, 0], sizes = [4, 32], strides = [1, 1]} : vector<4x96xf32> to vector<4x32xf32>
    %256 = arith.addf %254, %255 : vector<4x32xf32>
    %257 = arith.negf %256 : vector<4x32xf32>
    %258 = math.exp %257 : vector<4x32xf32>
    %cst_53 = arith.constant 1.000000e+00 : f32
    %259 = vector.broadcast %cst_53 : f32 to vector<4x32xf32>
    %260 = arith.addf %259, %258 : vector<4x32xf32>
    %261 = arith.divf %259, %260 : vector<4x32xf32>
    %262 = vector.extract_strided_slice %252 {offsets = [0, 32], sizes = [4, 32], strides = [1, 1]} : vector<4x96xf32> to vector<4x32xf32>
    %263 = vector.extract_strided_slice %253 {offsets = [0, 32], sizes = [4, 32], strides = [1, 1]} : vector<4x96xf32> to vector<4x32xf32>
    %264 = arith.addf %262, %263 : vector<4x32xf32>
    %265 = arith.negf %264 : vector<4x32xf32>
    %266 = math.exp %265 : vector<4x32xf32>
    %cst_54 = arith.constant 1.000000e+00 : f32
    %267 = vector.broadcast %cst_54 : f32 to vector<4x32xf32>
    %268 = arith.addf %267, %266 : vector<4x32xf32>
    %269 = arith.divf %267, %268 : vector<4x32xf32>
    %270 = vector.extract_strided_slice %252 {offsets = [0, 64], sizes = [4, 32], strides = [1, 1]} : vector<4x96xf32> to vector<4x32xf32>
    %271 = vector.extract_strided_slice %253 {offsets = [0, 64], sizes = [4, 32], strides = [1, 1]} : vector<4x96xf32> to vector<4x32xf32>
    %272 = vector.broadcast %14 : vector<1x32xf32> to vector<4x32xf32>
    %273 = arith.addf %271, %272 : vector<4x32xf32>
    %274 = arith.mulf %261, %273 : vector<4x32xf32>
    %275 = arith.addf %270, %274 : vector<4x32xf32>
    %276 = math.tanh %275 : vector<4x32xf32>
    %cst_55 = arith.constant 1.000000e+00 : f32
    %277 = vector.broadcast %cst_55 : f32 to vector<4x32xf32>
    %278 = arith.subf %277, %269 : vector<4x32xf32>
    %279 = arith.mulf %278, %276 : vector<4x32xf32>
    %280 = arith.mulf %269, %240 : vector<4x32xf32>
    %281 = arith.addf %279, %280 : vector<4x32xf32>
    %282 = vector.extract_strided_slice %11 {offsets = [16, 0], sizes = [4, 96], strides = [1, 1]} : vector<32x96xf32> to vector<4x96xf32>
    %cst_56 = arith.constant dense<0.000000e+00> : vector<4x96xf32>
    %283 = tpu.matmul %243, %13, %cst_56 {dimension_numbers = #tpu.dot_dimension_numbers<[1], [0], [0], [1], [0, 0, 1, 1], [], []>} : vector<4x32xf32>, vector<32x96xf32>, vector<4x96xf32> -> vector<4x96xf32>
    %284 = vector.extract_strided_slice %282 {offsets = [0, 0], sizes = [4, 32], strides = [1, 1]} : vector<4x96xf32> to vector<4x32xf32>
    %285 = vector.extract_strided_slice %283 {offsets = [0, 0], sizes = [4, 32], strides = [1, 1]} : vector<4x96xf32> to vector<4x32xf32>
    %286 = arith.addf %284, %285 : vector<4x32xf32>
    %287 = arith.negf %286 : vector<4x32xf32>
    %288 = math.exp %287 : vector<4x32xf32>
    %cst_57 = arith.constant 1.000000e+00 : f32
    %289 = vector.broadcast %cst_57 : f32 to vector<4x32xf32>
    %290 = arith.addf %289, %288 : vector<4x32xf32>
    %291 = arith.divf %289, %290 : vector<4x32xf32>
    %292 = vector.extract_strided_slice %282 {offsets = [0, 32], sizes = [4, 32], strides = [1, 1]} : vector<4x96xf32> to vector<4x32xf32>
    %293 = vector.extract_strided_slice %283 {offsets = [0, 32], sizes = [4, 32], strides = [1, 1]} : vector<4x96xf32> to vector<4x32xf32>
    %294 = arith.addf %292, %293 : vector<4x32xf32>
    %295 = arith.negf %294 : vector<4x32xf32>
    %296 = math.exp %295 : vector<4x32xf32>
    %cst_58 = arith.constant 1.000000e+00 : f32
    %297 = vector.broadcast %cst_58 : f32 to vector<4x32xf32>
    %298 = arith.addf %297, %296 : vector<4x32xf32>
    %299 = arith.divf %297, %298 : vector<4x32xf32>
    %300 = vector.extract_strided_slice %282 {offsets = [0, 64], sizes = [4, 32], strides = [1, 1]} : vector<4x96xf32> to vector<4x32xf32>
    %301 = vector.extract_strided_slice %283 {offsets = [0, 64], sizes = [4, 32], strides = [1, 1]} : vector<4x96xf32> to vector<4x32xf32>
    %302 = vector.broadcast %15 : vector<1x32xf32> to vector<4x32xf32>
    %303 = arith.addf %301, %302 : vector<4x32xf32>
    %304 = arith.mulf %291, %303 : vector<4x32xf32>
    %305 = arith.addf %300, %304 : vector<4x32xf32>
    %306 = math.tanh %305 : vector<4x32xf32>
    %cst_59 = arith.constant 1.000000e+00 : f32
    %307 = vector.broadcast %cst_59 : f32 to vector<4x32xf32>
    %308 = arith.subf %307, %299 : vector<4x32xf32>
    %309 = arith.mulf %308, %306 : vector<4x32xf32>
    %310 = arith.mulf %299, %243 : vector<4x32xf32>
    %311 = arith.addf %309, %310 : vector<4x32xf32>
    %c3_i32 = arith.constant 3 : i32
    %312 = vector.broadcast %c3_i32 : i32 to vector<4x1xi32>
    %313 = arith.cmpi sgt, %0, %312 : vector<4x1xi32>
    %c4_i32 = arith.constant 4 : i32
    %314 = vector.broadcast %c4_i32 : i32 to vector<4x1xi32>
    %315 = arith.cmpi sgt, %0, %314 : vector<4x1xi32>
    %316 = vector.shape_cast %313 : vector<4x1xi1> to vector<4x1xi1>
    %317 = vector.broadcast %316 : vector<4x1xi1> to vector<4x32xi1>
    %318 = arith.select %317, %281, %240 : vector<4x32xi1>, vector<4x32xf32>
    %319 = vector.shape_cast %315 : vector<4x1xi1> to vector<4x1xi1>
    %320 = vector.broadcast %319 : vector<4x1xi1> to vector<4x32xi1>
    %321 = arith.select %320, %311, %243 : vector<4x32xi1>, vector<4x32xf32>
    %cst_60 = arith.constant 0.000000e+00 : f32
    %322 = vector.shape_cast %313 : vector<4x1xi1> to vector<4x1xi1>
    %323 = vector.broadcast %322 : vector<4x1xi1> to vector<4x32xi1>
    %324 = vector.broadcast %cst_60 : f32 to vector<4x32xf32>
    %325 = arith.select %323, %281, %324 : vector<4x32xi1>, vector<4x32xf32>
    %cst_61 = arith.constant 0.000000e+00 : f32
    %326 = vector.shape_cast %315 : vector<4x1xi1> to vector<4x1xi1>
    %327 = vector.broadcast %326 : vector<4x1xi1> to vector<4x32xi1>
    %328 = vector.broadcast %cst_61 : f32 to vector<4x32xf32>
    %329 = arith.select %327, %311, %328 : vector<4x32xi1>, vector<4x32xf32>
    %330 = vector.extract_strided_slice %6 {offsets = [16, 0], sizes = [4, 96], strides = [1, 1]} : vector<32x96xf32> to vector<4x96xf32>
    %cst_62 = arith.constant dense<0.000000e+00> : vector<4x96xf32>
    %331 = tpu.matmul %318, %12, %cst_62 {dimension_numbers = #tpu.dot_dimension_numbers<[1], [0], [0], [1], [0, 0, 1, 1], [], []>} : vector<4x32xf32>, vector<32x96xf32>, vector<4x96xf32> -> vector<4x96xf32>
    %332 = vector.extract_strided_slice %330 {offsets = [0, 0], sizes = [4, 32], strides = [1, 1]} : vector<4x96xf32> to vector<4x32xf32>
    %333 = vector.extract_strided_slice %331 {offsets = [0, 0], sizes = [4, 32], strides = [1, 1]} : vector<4x96xf32> to vector<4x32xf32>
    %334 = arith.addf %332, %333 : vector<4x32xf32>
    %335 = arith.negf %334 : vector<4x32xf32>
    %336 = math.exp %335 : vector<4x32xf32>
    %cst_63 = arith.constant 1.000000e+00 : f32
    %337 = vector.broadcast %cst_63 : f32 to vector<4x32xf32>
    %338 = arith.addf %337, %336 : vector<4x32xf32>
    %339 = arith.divf %337, %338 : vector<4x32xf32>
    %340 = vector.extract_strided_slice %330 {offsets = [0, 32], sizes = [4, 32], strides = [1, 1]} : vector<4x96xf32> to vector<4x32xf32>
    %341 = vector.extract_strided_slice %331 {offsets = [0, 32], sizes = [4, 32], strides = [1, 1]} : vector<4x96xf32> to vector<4x32xf32>
    %342 = arith.addf %340, %341 : vector<4x32xf32>
    %343 = arith.negf %342 : vector<4x32xf32>
    %344 = math.exp %343 : vector<4x32xf32>
    %cst_64 = arith.constant 1.000000e+00 : f32
    %345 = vector.broadcast %cst_64 : f32 to vector<4x32xf32>
    %346 = arith.addf %345, %344 : vector<4x32xf32>
    %347 = arith.divf %345, %346 : vector<4x32xf32>
    %348 = vector.extract_strided_slice %330 {offsets = [0, 64], sizes = [4, 32], strides = [1, 1]} : vector<4x96xf32> to vector<4x32xf32>
    %349 = vector.extract_strided_slice %331 {offsets = [0, 64], sizes = [4, 32], strides = [1, 1]} : vector<4x96xf32> to vector<4x32xf32>
    %350 = vector.broadcast %14 : vector<1x32xf32> to vector<4x32xf32>
    %351 = arith.addf %349, %350 : vector<4x32xf32>
    %352 = arith.mulf %339, %351 : vector<4x32xf32>
    %353 = arith.addf %348, %352 : vector<4x32xf32>
    %354 = math.tanh %353 : vector<4x32xf32>
    %cst_65 = arith.constant 1.000000e+00 : f32
    %355 = vector.broadcast %cst_65 : f32 to vector<4x32xf32>
    %356 = arith.subf %355, %347 : vector<4x32xf32>
    %357 = arith.mulf %356, %354 : vector<4x32xf32>
    %358 = arith.mulf %347, %318 : vector<4x32xf32>
    %359 = arith.addf %357, %358 : vector<4x32xf32>
    %360 = vector.extract_strided_slice %11 {offsets = [12, 0], sizes = [4, 96], strides = [1, 1]} : vector<32x96xf32> to vector<4x96xf32>
    %cst_66 = arith.constant dense<0.000000e+00> : vector<4x96xf32>
    %361 = tpu.matmul %321, %13, %cst_66 {dimension_numbers = #tpu.dot_dimension_numbers<[1], [0], [0], [1], [0, 0, 1, 1], [], []>} : vector<4x32xf32>, vector<32x96xf32>, vector<4x96xf32> -> vector<4x96xf32>
    %362 = vector.extract_strided_slice %360 {offsets = [0, 0], sizes = [4, 32], strides = [1, 1]} : vector<4x96xf32> to vector<4x32xf32>
    %363 = vector.extract_strided_slice %361 {offsets = [0, 0], sizes = [4, 32], strides = [1, 1]} : vector<4x96xf32> to vector<4x32xf32>
    %364 = arith.addf %362, %363 : vector<4x32xf32>
    %365 = arith.negf %364 : vector<4x32xf32>
    %366 = math.exp %365 : vector<4x32xf32>
    %cst_67 = arith.constant 1.000000e+00 : f32
    %367 = vector.broadcast %cst_67 : f32 to vector<4x32xf32>
    %368 = arith.addf %367, %366 : vector<4x32xf32>
    %369 = arith.divf %367, %368 : vector<4x32xf32>
    %370 = vector.extract_strided_slice %360 {offsets = [0, 32], sizes = [4, 32], strides = [1, 1]} : vector<4x96xf32> to vector<4x32xf32>
    %371 = vector.extract_strided_slice %361 {offsets = [0, 32], sizes = [4, 32], strides = [1, 1]} : vector<4x96xf32> to vector<4x32xf32>
    %372 = arith.addf %370, %371 : vector<4x32xf32>
    %373 = arith.negf %372 : vector<4x32xf32>
    %374 = math.exp %373 : vector<4x32xf32>
    %cst_68 = arith.constant 1.000000e+00 : f32
    %375 = vector.broadcast %cst_68 : f32 to vector<4x32xf32>
    %376 = arith.addf %375, %374 : vector<4x32xf32>
    %377 = arith.divf %375, %376 : vector<4x32xf32>
    %378 = vector.extract_strided_slice %360 {offsets = [0, 64], sizes = [4, 32], strides = [1, 1]} : vector<4x96xf32> to vector<4x32xf32>
    %379 = vector.extract_strided_slice %361 {offsets = [0, 64], sizes = [4, 32], strides = [1, 1]} : vector<4x96xf32> to vector<4x32xf32>
    %380 = vector.broadcast %15 : vector<1x32xf32> to vector<4x32xf32>
    %381 = arith.addf %379, %380 : vector<4x32xf32>
    %382 = arith.mulf %369, %381 : vector<4x32xf32>
    %383 = arith.addf %378, %382 : vector<4x32xf32>
    %384 = math.tanh %383 : vector<4x32xf32>
    %cst_69 = arith.constant 1.000000e+00 : f32
    %385 = vector.broadcast %cst_69 : f32 to vector<4x32xf32>
    %386 = arith.subf %385, %377 : vector<4x32xf32>
    %387 = arith.mulf %386, %384 : vector<4x32xf32>
    %388 = arith.mulf %377, %321 : vector<4x32xf32>
    %389 = arith.addf %387, %388 : vector<4x32xf32>
    %c4_i32_70 = arith.constant 4 : i32
    %390 = vector.broadcast %c4_i32_70 : i32 to vector<4x1xi32>
    %391 = arith.cmpi sgt, %0, %390 : vector<4x1xi32>
    %c3_i32_71 = arith.constant 3 : i32
    %392 = vector.broadcast %c3_i32_71 : i32 to vector<4x1xi32>
    %393 = arith.cmpi sgt, %0, %392 : vector<4x1xi32>
    %394 = vector.shape_cast %391 : vector<4x1xi1> to vector<4x1xi1>
    %395 = vector.broadcast %394 : vector<4x1xi1> to vector<4x32xi1>
    %396 = arith.select %395, %359, %318 : vector<4x32xi1>, vector<4x32xf32>
    %397 = vector.shape_cast %393 : vector<4x1xi1> to vector<4x1xi1>
    %398 = vector.broadcast %397 : vector<4x1xi1> to vector<4x32xi1>
    %399 = arith.select %398, %389, %321 : vector<4x32xi1>, vector<4x32xf32>
    %cst_72 = arith.constant 0.000000e+00 : f32
    %400 = vector.shape_cast %391 : vector<4x1xi1> to vector<4x1xi1>
    %401 = vector.broadcast %400 : vector<4x1xi1> to vector<4x32xi1>
    %402 = vector.broadcast %cst_72 : f32 to vector<4x32xf32>
    %403 = arith.select %401, %359, %402 : vector<4x32xi1>, vector<4x32xf32>
    %cst_73 = arith.constant 0.000000e+00 : f32
    %404 = vector.shape_cast %393 : vector<4x1xi1> to vector<4x1xi1>
    %405 = vector.broadcast %404 : vector<4x1xi1> to vector<4x32xi1>
    %406 = vector.broadcast %cst_73 : f32 to vector<4x32xf32>
    %407 = arith.select %405, %389, %406 : vector<4x32xi1>, vector<4x32xf32>
    %408 = vector.extract_strided_slice %6 {offsets = [20, 0], sizes = [4, 96], strides = [1, 1]} : vector<32x96xf32> to vector<4x96xf32>
    %cst_74 = arith.constant dense<0.000000e+00> : vector<4x96xf32>
    %409 = tpu.matmul %396, %12, %cst_74 {dimension_numbers = #tpu.dot_dimension_numbers<[1], [0], [0], [1], [0, 0, 1, 1], [], []>} : vector<4x32xf32>, vector<32x96xf32>, vector<4x96xf32> -> vector<4x96xf32>
    %410 = vector.extract_strided_slice %408 {offsets = [0, 0], sizes = [4, 32], strides = [1, 1]} : vector<4x96xf32> to vector<4x32xf32>
    %411 = vector.extract_strided_slice %409 {offsets = [0, 0], sizes = [4, 32], strides = [1, 1]} : vector<4x96xf32> to vector<4x32xf32>
    %412 = arith.addf %410, %411 : vector<4x32xf32>
    %413 = arith.negf %412 : vector<4x32xf32>
    %414 = math.exp %413 : vector<4x32xf32>
    %cst_75 = arith.constant 1.000000e+00 : f32
    %415 = vector.broadcast %cst_75 : f32 to vector<4x32xf32>
    %416 = arith.addf %415, %414 : vector<4x32xf32>
    %417 = arith.divf %415, %416 : vector<4x32xf32>
    %418 = vector.extract_strided_slice %408 {offsets = [0, 32], sizes = [4, 32], strides = [1, 1]} : vector<4x96xf32> to vector<4x32xf32>
    %419 = vector.extract_strided_slice %409 {offsets = [0, 32], sizes = [4, 32], strides = [1, 1]} : vector<4x96xf32> to vector<4x32xf32>
    %420 = arith.addf %418, %419 : vector<4x32xf32>
    %421 = arith.negf %420 : vector<4x32xf32>
    %422 = math.exp %421 : vector<4x32xf32>
    %cst_76 = arith.constant 1.000000e+00 : f32
    %423 = vector.broadcast %cst_76 : f32 to vector<4x32xf32>
    %424 = arith.addf %423, %422 : vector<4x32xf32>
    %425 = arith.divf %423, %424 : vector<4x32xf32>
    %426 = vector.extract_strided_slice %408 {offsets = [0, 64], sizes = [4, 32], strides = [1, 1]} : vector<4x96xf32> to vector<4x32xf32>
    %427 = vector.extract_strided_slice %409 {offsets = [0, 64], sizes = [4, 32], strides = [1, 1]} : vector<4x96xf32> to vector<4x32xf32>
    %428 = vector.broadcast %14 : vector<1x32xf32> to vector<4x32xf32>
    %429 = arith.addf %427, %428 : vector<4x32xf32>
    %430 = arith.mulf %417, %429 : vector<4x32xf32>
    %431 = arith.addf %426, %430 : vector<4x32xf32>
    %432 = math.tanh %431 : vector<4x32xf32>
    %cst_77 = arith.constant 1.000000e+00 : f32
    %433 = vector.broadcast %cst_77 : f32 to vector<4x32xf32>
    %434 = arith.subf %433, %425 : vector<4x32xf32>
    %435 = arith.mulf %434, %432 : vector<4x32xf32>
    %436 = arith.mulf %425, %396 : vector<4x32xf32>
    %437 = arith.addf %435, %436 : vector<4x32xf32>
    %438 = vector.extract_strided_slice %11 {offsets = [8, 0], sizes = [4, 96], strides = [1, 1]} : vector<32x96xf32> to vector<4x96xf32>
    %cst_78 = arith.constant dense<0.000000e+00> : vector<4x96xf32>
    %439 = tpu.matmul %399, %13, %cst_78 {dimension_numbers = #tpu.dot_dimension_numbers<[1], [0], [0], [1], [0, 0, 1, 1], [], []>} : vector<4x32xf32>, vector<32x96xf32>, vector<4x96xf32> -> vector<4x96xf32>
    %440 = vector.extract_strided_slice %438 {offsets = [0, 0], sizes = [4, 32], strides = [1, 1]} : vector<4x96xf32> to vector<4x32xf32>
    %441 = vector.extract_strided_slice %439 {offsets = [0, 0], sizes = [4, 32], strides = [1, 1]} : vector<4x96xf32> to vector<4x32xf32>
    %442 = arith.addf %440, %441 : vector<4x32xf32>
    %443 = arith.negf %442 : vector<4x32xf32>
    %444 = math.exp %443 : vector<4x32xf32>
    %cst_79 = arith.constant 1.000000e+00 : f32
    %445 = vector.broadcast %cst_79 : f32 to vector<4x32xf32>
    %446 = arith.addf %445, %444 : vector<4x32xf32>
    %447 = arith.divf %445, %446 : vector<4x32xf32>
    %448 = vector.extract_strided_slice %438 {offsets = [0, 32], sizes = [4, 32], strides = [1, 1]} : vector<4x96xf32> to vector<4x32xf32>
    %449 = vector.extract_strided_slice %439 {offsets = [0, 32], sizes = [4, 32], strides = [1, 1]} : vector<4x96xf32> to vector<4x32xf32>
    %450 = arith.addf %448, %449 : vector<4x32xf32>
    %451 = arith.negf %450 : vector<4x32xf32>
    %452 = math.exp %451 : vector<4x32xf32>
    %cst_80 = arith.constant 1.000000e+00 : f32
    %453 = vector.broadcast %cst_80 : f32 to vector<4x32xf32>
    %454 = arith.addf %453, %452 : vector<4x32xf32>
    %455 = arith.divf %453, %454 : vector<4x32xf32>
    %456 = vector.extract_strided_slice %438 {offsets = [0, 64], sizes = [4, 32], strides = [1, 1]} : vector<4x96xf32> to vector<4x32xf32>
    %457 = vector.extract_strided_slice %439 {offsets = [0, 64], sizes = [4, 32], strides = [1, 1]} : vector<4x96xf32> to vector<4x32xf32>
    %458 = vector.broadcast %15 : vector<1x32xf32> to vector<4x32xf32>
    %459 = arith.addf %457, %458 : vector<4x32xf32>
    %460 = arith.mulf %447, %459 : vector<4x32xf32>
    %461 = arith.addf %456, %460 : vector<4x32xf32>
    %462 = math.tanh %461 : vector<4x32xf32>
    %cst_81 = arith.constant 1.000000e+00 : f32
    %463 = vector.broadcast %cst_81 : f32 to vector<4x32xf32>
    %464 = arith.subf %463, %455 : vector<4x32xf32>
    %465 = arith.mulf %464, %462 : vector<4x32xf32>
    %466 = arith.mulf %455, %399 : vector<4x32xf32>
    %467 = arith.addf %465, %466 : vector<4x32xf32>
    %c5_i32_82 = arith.constant 5 : i32
    %468 = vector.broadcast %c5_i32_82 : i32 to vector<4x1xi32>
    %469 = arith.cmpi sgt, %0, %468 : vector<4x1xi32>
    %c2_i32_83 = arith.constant 2 : i32
    %470 = vector.broadcast %c2_i32_83 : i32 to vector<4x1xi32>
    %471 = arith.cmpi sgt, %0, %470 : vector<4x1xi32>
    %472 = vector.shape_cast %469 : vector<4x1xi1> to vector<4x1xi1>
    %473 = vector.broadcast %472 : vector<4x1xi1> to vector<4x32xi1>
    %474 = arith.select %473, %437, %396 : vector<4x32xi1>, vector<4x32xf32>
    %475 = vector.shape_cast %471 : vector<4x1xi1> to vector<4x1xi1>
    %476 = vector.broadcast %475 : vector<4x1xi1> to vector<4x32xi1>
    %477 = arith.select %476, %467, %399 : vector<4x32xi1>, vector<4x32xf32>
    %cst_84 = arith.constant 0.000000e+00 : f32
    %478 = vector.shape_cast %469 : vector<4x1xi1> to vector<4x1xi1>
    %479 = vector.broadcast %478 : vector<4x1xi1> to vector<4x32xi1>
    %480 = vector.broadcast %cst_84 : f32 to vector<4x32xf32>
    %481 = arith.select %479, %437, %480 : vector<4x32xi1>, vector<4x32xf32>
    %cst_85 = arith.constant 0.000000e+00 : f32
    %482 = vector.shape_cast %471 : vector<4x1xi1> to vector<4x1xi1>
    %483 = vector.broadcast %482 : vector<4x1xi1> to vector<4x32xi1>
    %484 = vector.broadcast %cst_85 : f32 to vector<4x32xf32>
    %485 = arith.select %483, %467, %484 : vector<4x32xi1>, vector<4x32xf32>
    %486 = vector.extract_strided_slice %6 {offsets = [24, 0], sizes = [4, 96], strides = [1, 1]} : vector<32x96xf32> to vector<4x96xf32>
    %cst_86 = arith.constant dense<0.000000e+00> : vector<4x96xf32>
    %487 = tpu.matmul %474, %12, %cst_86 {dimension_numbers = #tpu.dot_dimension_numbers<[1], [0], [0], [1], [0, 0, 1, 1], [], []>} : vector<4x32xf32>, vector<32x96xf32>, vector<4x96xf32> -> vector<4x96xf32>
    %488 = vector.extract_strided_slice %486 {offsets = [0, 0], sizes = [4, 32], strides = [1, 1]} : vector<4x96xf32> to vector<4x32xf32>
    %489 = vector.extract_strided_slice %487 {offsets = [0, 0], sizes = [4, 32], strides = [1, 1]} : vector<4x96xf32> to vector<4x32xf32>
    %490 = arith.addf %488, %489 : vector<4x32xf32>
    %491 = arith.negf %490 : vector<4x32xf32>
    %492 = math.exp %491 : vector<4x32xf32>
    %cst_87 = arith.constant 1.000000e+00 : f32
    %493 = vector.broadcast %cst_87 : f32 to vector<4x32xf32>
    %494 = arith.addf %493, %492 : vector<4x32xf32>
    %495 = arith.divf %493, %494 : vector<4x32xf32>
    %496 = vector.extract_strided_slice %486 {offsets = [0, 32], sizes = [4, 32], strides = [1, 1]} : vector<4x96xf32> to vector<4x32xf32>
    %497 = vector.extract_strided_slice %487 {offsets = [0, 32], sizes = [4, 32], strides = [1, 1]} : vector<4x96xf32> to vector<4x32xf32>
    %498 = arith.addf %496, %497 : vector<4x32xf32>
    %499 = arith.negf %498 : vector<4x32xf32>
    %500 = math.exp %499 : vector<4x32xf32>
    %cst_88 = arith.constant 1.000000e+00 : f32
    %501 = vector.broadcast %cst_88 : f32 to vector<4x32xf32>
    %502 = arith.addf %501, %500 : vector<4x32xf32>
    %503 = arith.divf %501, %502 : vector<4x32xf32>
    %504 = vector.extract_strided_slice %486 {offsets = [0, 64], sizes = [4, 32], strides = [1, 1]} : vector<4x96xf32> to vector<4x32xf32>
    %505 = vector.extract_strided_slice %487 {offsets = [0, 64], sizes = [4, 32], strides = [1, 1]} : vector<4x96xf32> to vector<4x32xf32>
    %506 = vector.broadcast %14 : vector<1x32xf32> to vector<4x32xf32>
    %507 = arith.addf %505, %506 : vector<4x32xf32>
    %508 = arith.mulf %495, %507 : vector<4x32xf32>
    %509 = arith.addf %504, %508 : vector<4x32xf32>
    %510 = math.tanh %509 : vector<4x32xf32>
    %cst_89 = arith.constant 1.000000e+00 : f32
    %511 = vector.broadcast %cst_89 : f32 to vector<4x32xf32>
    %512 = arith.subf %511, %503 : vector<4x32xf32>
    %513 = arith.mulf %512, %510 : vector<4x32xf32>
    %514 = arith.mulf %503, %474 : vector<4x32xf32>
    %515 = arith.addf %513, %514 : vector<4x32xf32>
    %516 = vector.extract_strided_slice %11 {offsets = [4, 0], sizes = [4, 96], strides = [1, 1]} : vector<32x96xf32> to vector<4x96xf32>
    %cst_90 = arith.constant dense<0.000000e+00> : vector<4x96xf32>
    %517 = tpu.matmul %477, %13, %cst_90 {dimension_numbers = #tpu.dot_dimension_numbers<[1], [0], [0], [1], [0, 0, 1, 1], [], []>} : vector<4x32xf32>, vector<32x96xf32>, vector<4x96xf32> -> vector<4x96xf32>
    %518 = vector.extract_strided_slice %516 {offsets = [0, 0], sizes = [4, 32], strides = [1, 1]} : vector<4x96xf32> to vector<4x32xf32>
    %519 = vector.extract_strided_slice %517 {offsets = [0, 0], sizes = [4, 32], strides = [1, 1]} : vector<4x96xf32> to vector<4x32xf32>
    %520 = arith.addf %518, %519 : vector<4x32xf32>
    %521 = arith.negf %520 : vector<4x32xf32>
    %522 = math.exp %521 : vector<4x32xf32>
    %cst_91 = arith.constant 1.000000e+00 : f32
    %523 = vector.broadcast %cst_91 : f32 to vector<4x32xf32>
    %524 = arith.addf %523, %522 : vector<4x32xf32>
    %525 = arith.divf %523, %524 : vector<4x32xf32>
    %526 = vector.extract_strided_slice %516 {offsets = [0, 32], sizes = [4, 32], strides = [1, 1]} : vector<4x96xf32> to vector<4x32xf32>
    %527 = vector.extract_strided_slice %517 {offsets = [0, 32], sizes = [4, 32], strides = [1, 1]} : vector<4x96xf32> to vector<4x32xf32>
    %528 = arith.addf %526, %527 : vector<4x32xf32>
    %529 = arith.negf %528 : vector<4x32xf32>
    %530 = math.exp %529 : vector<4x32xf32>
    %cst_92 = arith.constant 1.000000e+00 : f32
    %531 = vector.broadcast %cst_92 : f32 to vector<4x32xf32>
    %532 = arith.addf %531, %530 : vector<4x32xf32>
    %533 = arith.divf %531, %532 : vector<4x32xf32>
    %534 = vector.extract_strided_slice %516 {offsets = [0, 64], sizes = [4, 32], strides = [1, 1]} : vector<4x96xf32> to vector<4x32xf32>
    %535 = vector.extract_strided_slice %517 {offsets = [0, 64], sizes = [4, 32], strides = [1, 1]} : vector<4x96xf32> to vector<4x32xf32>
    %536 = vector.broadcast %15 : vector<1x32xf32> to vector<4x32xf32>
    %537 = arith.addf %535, %536 : vector<4x32xf32>
    %538 = arith.mulf %525, %537 : vector<4x32xf32>
    %539 = arith.addf %534, %538 : vector<4x32xf32>
    %540 = math.tanh %539 : vector<4x32xf32>
    %cst_93 = arith.constant 1.000000e+00 : f32
    %541 = vector.broadcast %cst_93 : f32 to vector<4x32xf32>
    %542 = arith.subf %541, %533 : vector<4x32xf32>
    %543 = arith.mulf %542, %540 : vector<4x32xf32>
    %544 = arith.mulf %533, %477 : vector<4x32xf32>
    %545 = arith.addf %543, %544 : vector<4x32xf32>
    %c6_i32_94 = arith.constant 6 : i32
    %546 = vector.broadcast %c6_i32_94 : i32 to vector<4x1xi32>
    %547 = arith.cmpi sgt, %0, %546 : vector<4x1xi32>
    %c1_i32_95 = arith.constant 1 : i32
    %548 = vector.broadcast %c1_i32_95 : i32 to vector<4x1xi32>
    %549 = arith.cmpi sgt, %0, %548 : vector<4x1xi32>
    %550 = vector.shape_cast %547 : vector<4x1xi1> to vector<4x1xi1>
    %551 = vector.broadcast %550 : vector<4x1xi1> to vector<4x32xi1>
    %552 = arith.select %551, %515, %474 : vector<4x32xi1>, vector<4x32xf32>
    %553 = vector.shape_cast %549 : vector<4x1xi1> to vector<4x1xi1>
    %554 = vector.broadcast %553 : vector<4x1xi1> to vector<4x32xi1>
    %555 = arith.select %554, %545, %477 : vector<4x32xi1>, vector<4x32xf32>
    %cst_96 = arith.constant 0.000000e+00 : f32
    %556 = vector.shape_cast %547 : vector<4x1xi1> to vector<4x1xi1>
    %557 = vector.broadcast %556 : vector<4x1xi1> to vector<4x32xi1>
    %558 = vector.broadcast %cst_96 : f32 to vector<4x32xf32>
    %559 = arith.select %557, %515, %558 : vector<4x32xi1>, vector<4x32xf32>
    %cst_97 = arith.constant 0.000000e+00 : f32
    %560 = vector.shape_cast %549 : vector<4x1xi1> to vector<4x1xi1>
    %561 = vector.broadcast %560 : vector<4x1xi1> to vector<4x32xi1>
    %562 = vector.broadcast %cst_97 : f32 to vector<4x32xf32>
    %563 = arith.select %561, %545, %562 : vector<4x32xi1>, vector<4x32xf32>
    %564 = vector.extract_strided_slice %6 {offsets = [28, 0], sizes = [4, 96], strides = [1, 1]} : vector<32x96xf32> to vector<4x96xf32>
    %cst_98 = arith.constant dense<0.000000e+00> : vector<4x96xf32>
    %565 = tpu.matmul %552, %12, %cst_98 {dimension_numbers = #tpu.dot_dimension_numbers<[1], [0], [0], [1], [0, 0, 1, 1], [], []>} : vector<4x32xf32>, vector<32x96xf32>, vector<4x96xf32> -> vector<4x96xf32>
    %566 = vector.extract_strided_slice %564 {offsets = [0, 0], sizes = [4, 32], strides = [1, 1]} : vector<4x96xf32> to vector<4x32xf32>
    %567 = vector.extract_strided_slice %565 {offsets = [0, 0], sizes = [4, 32], strides = [1, 1]} : vector<4x96xf32> to vector<4x32xf32>
    %568 = arith.addf %566, %567 : vector<4x32xf32>
    %569 = arith.negf %568 : vector<4x32xf32>
    %570 = math.exp %569 : vector<4x32xf32>
    %cst_99 = arith.constant 1.000000e+00 : f32
    %571 = vector.broadcast %cst_99 : f32 to vector<4x32xf32>
    %572 = arith.addf %571, %570 : vector<4x32xf32>
    %573 = arith.divf %571, %572 : vector<4x32xf32>
    %574 = vector.extract_strided_slice %564 {offsets = [0, 32], sizes = [4, 32], strides = [1, 1]} : vector<4x96xf32> to vector<4x32xf32>
    %575 = vector.extract_strided_slice %565 {offsets = [0, 32], sizes = [4, 32], strides = [1, 1]} : vector<4x96xf32> to vector<4x32xf32>
    %576 = arith.addf %574, %575 : vector<4x32xf32>
    %577 = arith.negf %576 : vector<4x32xf32>
    %578 = math.exp %577 : vector<4x32xf32>
    %cst_100 = arith.constant 1.000000e+00 : f32
    %579 = vector.broadcast %cst_100 : f32 to vector<4x32xf32>
    %580 = arith.addf %579, %578 : vector<4x32xf32>
    %581 = arith.divf %579, %580 : vector<4x32xf32>
    %582 = vector.extract_strided_slice %564 {offsets = [0, 64], sizes = [4, 32], strides = [1, 1]} : vector<4x96xf32> to vector<4x32xf32>
    %583 = vector.extract_strided_slice %565 {offsets = [0, 64], sizes = [4, 32], strides = [1, 1]} : vector<4x96xf32> to vector<4x32xf32>
    %584 = vector.broadcast %14 : vector<1x32xf32> to vector<4x32xf32>
    %585 = arith.addf %583, %584 : vector<4x32xf32>
    %586 = arith.mulf %573, %585 : vector<4x32xf32>
    %587 = arith.addf %582, %586 : vector<4x32xf32>
    %588 = math.tanh %587 : vector<4x32xf32>
    %cst_101 = arith.constant 1.000000e+00 : f32
    %589 = vector.broadcast %cst_101 : f32 to vector<4x32xf32>
    %590 = arith.subf %589, %581 : vector<4x32xf32>
    %591 = arith.mulf %590, %588 : vector<4x32xf32>
    %592 = arith.mulf %581, %552 : vector<4x32xf32>
    %593 = arith.addf %591, %592 : vector<4x32xf32>
    %594 = vector.extract_strided_slice %11 {offsets = [0, 0], sizes = [4, 96], strides = [1, 1]} : vector<32x96xf32> to vector<4x96xf32>
    %cst_102 = arith.constant dense<0.000000e+00> : vector<4x96xf32>
    %595 = tpu.matmul %555, %13, %cst_102 {dimension_numbers = #tpu.dot_dimension_numbers<[1], [0], [0], [1], [0, 0, 1, 1], [], []>} : vector<4x32xf32>, vector<32x96xf32>, vector<4x96xf32> -> vector<4x96xf32>
    %596 = vector.extract_strided_slice %594 {offsets = [0, 0], sizes = [4, 32], strides = [1, 1]} : vector<4x96xf32> to vector<4x32xf32>
    %597 = vector.extract_strided_slice %595 {offsets = [0, 0], sizes = [4, 32], strides = [1, 1]} : vector<4x96xf32> to vector<4x32xf32>
    %598 = arith.addf %596, %597 : vector<4x32xf32>
    %599 = arith.negf %598 : vector<4x32xf32>
    %600 = math.exp %599 : vector<4x32xf32>
    %cst_103 = arith.constant 1.000000e+00 : f32
    %601 = vector.broadcast %cst_103 : f32 to vector<4x32xf32>
    %602 = arith.addf %601, %600 : vector<4x32xf32>
    %603 = arith.divf %601, %602 : vector<4x32xf32>
    %604 = vector.extract_strided_slice %594 {offsets = [0, 32], sizes = [4, 32], strides = [1, 1]} : vector<4x96xf32> to vector<4x32xf32>
    %605 = vector.extract_strided_slice %595 {offsets = [0, 32], sizes = [4, 32], strides = [1, 1]} : vector<4x96xf32> to vector<4x32xf32>
    %606 = arith.addf %604, %605 : vector<4x32xf32>
    %607 = arith.negf %606 : vector<4x32xf32>
    %608 = math.exp %607 : vector<4x32xf32>
    %cst_104 = arith.constant 1.000000e+00 : f32
    %609 = vector.broadcast %cst_104 : f32 to vector<4x32xf32>
    %610 = arith.addf %609, %608 : vector<4x32xf32>
    %611 = arith.divf %609, %610 : vector<4x32xf32>
    %612 = vector.extract_strided_slice %594 {offsets = [0, 64], sizes = [4, 32], strides = [1, 1]} : vector<4x96xf32> to vector<4x32xf32>
    %613 = vector.extract_strided_slice %595 {offsets = [0, 64], sizes = [4, 32], strides = [1, 1]} : vector<4x96xf32> to vector<4x32xf32>
    %614 = vector.broadcast %15 : vector<1x32xf32> to vector<4x32xf32>
    %615 = arith.addf %613, %614 : vector<4x32xf32>
    %616 = arith.mulf %603, %615 : vector<4x32xf32>
    %617 = arith.addf %612, %616 : vector<4x32xf32>
    %618 = math.tanh %617 : vector<4x32xf32>
    %cst_105 = arith.constant 1.000000e+00 : f32
    %619 = vector.broadcast %cst_105 : f32 to vector<4x32xf32>
    %620 = arith.subf %619, %611 : vector<4x32xf32>
    %621 = arith.mulf %620, %618 : vector<4x32xf32>
    %622 = arith.mulf %611, %555 : vector<4x32xf32>
    %623 = arith.addf %621, %622 : vector<4x32xf32>
    %c7_i32_106 = arith.constant 7 : i32
    %624 = vector.broadcast %c7_i32_106 : i32 to vector<4x1xi32>
    %625 = arith.cmpi sgt, %0, %624 : vector<4x1xi32>
    %c0_i32_107 = arith.constant 0 : i32
    %626 = vector.broadcast %c0_i32_107 : i32 to vector<4x1xi32>
    %627 = arith.cmpi sgt, %0, %626 : vector<4x1xi32>
    %628 = vector.shape_cast %625 : vector<4x1xi1> to vector<4x1xi1>
    %629 = vector.broadcast %628 : vector<4x1xi1> to vector<4x32xi1>
    %630 = arith.select %629, %593, %552 : vector<4x32xi1>, vector<4x32xf32>
    %631 = vector.shape_cast %627 : vector<4x1xi1> to vector<4x1xi1>
    %632 = vector.broadcast %631 : vector<4x1xi1> to vector<4x32xi1>
    %633 = arith.select %632, %623, %555 : vector<4x32xi1>, vector<4x32xf32>
    %cst_108 = arith.constant 0.000000e+00 : f32
    %634 = vector.shape_cast %625 : vector<4x1xi1> to vector<4x1xi1>
    %635 = vector.broadcast %634 : vector<4x1xi1> to vector<4x32xi1>
    %636 = vector.broadcast %cst_108 : f32 to vector<4x32xf32>
    %637 = arith.select %635, %593, %636 : vector<4x32xi1>, vector<4x32xf32>
    %cst_109 = arith.constant 0.000000e+00 : f32
    %638 = vector.shape_cast %627 : vector<4x1xi1> to vector<4x1xi1>
    %639 = vector.broadcast %638 : vector<4x1xi1> to vector<4x32xi1>
    %640 = vector.broadcast %cst_109 : f32 to vector<4x32xf32>
    %641 = arith.select %639, %623, %640 : vector<4x32xi1>, vector<4x32xf32>
    %642 = arith.addf %91, %641 : vector<4x32xf32>
    %c0_110 = arith.constant 0 : index
    %c0_111 = arith.constant 0 : index
    %c0_112 = arith.constant 0 : index
    %643 = vector.load %arg10[%c0_110, %c0_111, %c0_112] : memref<8x4x32xf32, #tpu.memory_space<vmem>>, vector<1x4x32xf32>
    %644 = vector.shape_cast %643 : vector<1x4x32xf32> to vector<4x32xf32>
    %645 = vector.shape_cast %642 : vector<4x32xf32> to vector<1x4x32xf32>
    tpu.vector_store %arg10[%c0_110, %c0_111, %c0_112], %645 {strides = array<i32>} : memref<8x4x32xf32, #tpu.memory_space<vmem>>, vector<1x4x32xf32>,
    %646 = arith.addf %169, %563 : vector<4x32xf32>
    %c1 = arith.constant 1 : index
    %c0_113 = arith.constant 0 : index
    %c0_114 = arith.constant 0 : index
    %647 = vector.load %arg10[%c1, %c0_113, %c0_114] : memref<8x4x32xf32, #tpu.memory_space<vmem>>, vector<1x4x32xf32>
    %648 = vector.shape_cast %647 : vector<1x4x32xf32> to vector<4x32xf32>
    %649 = vector.shape_cast %646 : vector<4x32xf32> to vector<1x4x32xf32>
    tpu.vector_store %arg10[%c1, %c0_113, %c0_114], %649 {strides = array<i32>} : memref<8x4x32xf32, #tpu.memory_space<vmem>>, vector<1x4x32xf32>,
    %650 = arith.addf %247, %485 : vector<4x32xf32>
    %c2 = arith.constant 2 : index
    %c0_115 = arith.constant 0 : index
    %c0_116 = arith.constant 0 : index
    %651 = vector.load %arg10[%c2, %c0_115, %c0_116] : memref<8x4x32xf32, #tpu.memory_space<vmem>>, vector<1x4x32xf32>
    %652 = vector.shape_cast %651 : vector<1x4x32xf32> to vector<4x32xf32>
    %653 = vector.shape_cast %650 : vector<4x32xf32> to vector<1x4x32xf32>
    tpu.vector_store %arg10[%c2, %c0_115, %c0_116], %653 {strides = array<i32>} : memref<8x4x32xf32, #tpu.memory_space<vmem>>, vector<1x4x32xf32>,
    %654 = arith.addf %325, %407 : vector<4x32xf32>
    %c3 = arith.constant 3 : index
    %c0_117 = arith.constant 0 : index
    %c0_118 = arith.constant 0 : index
    %655 = vector.load %arg10[%c3, %c0_117, %c0_118] : memref<8x4x32xf32, #tpu.memory_space<vmem>>, vector<1x4x32xf32>
    %656 = vector.shape_cast %655 : vector<1x4x32xf32> to vector<4x32xf32>
    %657 = vector.shape_cast %654 : vector<4x32xf32> to vector<1x4x32xf32>
    tpu.vector_store %arg10[%c3, %c0_117, %c0_118], %657 {strides = array<i32>} : memref<8x4x32xf32, #tpu.memory_space<vmem>>, vector<1x4x32xf32>,
    %658 = arith.addf %403, %329 : vector<4x32xf32>
    %c4 = arith.constant 4 : index
    %c0_119 = arith.constant 0 : index
    %c0_120 = arith.constant 0 : index
    %659 = vector.load %arg10[%c4, %c0_119, %c0_120] : memref<8x4x32xf32, #tpu.memory_space<vmem>>, vector<1x4x32xf32>
    %660 = vector.shape_cast %659 : vector<1x4x32xf32> to vector<4x32xf32>
    %661 = vector.shape_cast %658 : vector<4x32xf32> to vector<1x4x32xf32>
    tpu.vector_store %arg10[%c4, %c0_119, %c0_120], %661 {strides = array<i32>} : memref<8x4x32xf32, #tpu.memory_space<vmem>>, vector<1x4x32xf32>,
    %662 = arith.addf %481, %251 : vector<4x32xf32>
    %c5 = arith.constant 5 : index
    %c0_121 = arith.constant 0 : index
    %c0_122 = arith.constant 0 : index
    %663 = vector.load %arg10[%c5, %c0_121, %c0_122] : memref<8x4x32xf32, #tpu.memory_space<vmem>>, vector<1x4x32xf32>
    %664 = vector.shape_cast %663 : vector<1x4x32xf32> to vector<4x32xf32>
    %665 = vector.shape_cast %662 : vector<4x32xf32> to vector<1x4x32xf32>
    tpu.vector_store %arg10[%c5, %c0_121, %c0_122], %665 {strides = array<i32>} : memref<8x4x32xf32, #tpu.memory_space<vmem>>, vector<1x4x32xf32>,
    %666 = arith.addf %559, %173 : vector<4x32xf32>
    %c6 = arith.constant 6 : index
    %c0_123 = arith.constant 0 : index
    %c0_124 = arith.constant 0 : index
    %667 = vector.load %arg10[%c6, %c0_123, %c0_124] : memref<8x4x32xf32, #tpu.memory_space<vmem>>, vector<1x4x32xf32>
    %668 = vector.shape_cast %667 : vector<1x4x32xf32> to vector<4x32xf32>
    %669 = vector.shape_cast %666 : vector<4x32xf32> to vector<1x4x32xf32>
    tpu.vector_store %arg10[%c6, %c0_123, %c0_124], %669 {strides = array<i32>} : memref<8x4x32xf32, #tpu.memory_space<vmem>>, vector<1x4x32xf32>,
    %670 = arith.addf %637, %95 : vector<4x32xf32>
    %c7 = arith.constant 7 : index
    %c0_125 = arith.constant 0 : index
    %c0_126 = arith.constant 0 : index
    %671 = vector.load %arg10[%c7, %c0_125, %c0_126] : memref<8x4x32xf32, #tpu.memory_space<vmem>>, vector<1x4x32xf32>
    %672 = vector.shape_cast %671 : vector<1x4x32xf32> to vector<4x32xf32>
    %673 = vector.shape_cast %670 : vector<4x32xf32> to vector<1x4x32xf32>
    tpu.vector_store %arg10[%c7, %c0_125, %c0_126], %673 {strides = array<i32>} : memref<8x4x32xf32, #tpu.memory_space<vmem>>, vector<1x4x32xf32>,
    %c0_127 = arith.constant 0 : index
    %c0_128 = arith.constant 0 : index
    %c0_129 = arith.constant 0 : index
    %674 = vector.load %arg11[%c0_127, %c0_128, %c0_129] : memref<2x4x32xf32, #tpu.memory_space<vmem>>, vector<1x4x32xf32>
    %675 = vector.shape_cast %674 : vector<1x4x32xf32> to vector<4x32xf32>
    %676 = vector.shape_cast %630 : vector<4x32xf32> to vector<1x4x32xf32>
    tpu.vector_store %arg11[%c0_127, %c0_128, %c0_129], %676 {strides = array<i32>} : memref<2x4x32xf32, #tpu.memory_space<vmem>>, vector<1x4x32xf32>,
    %c1_130 = arith.constant 1 : index
    %c0_131 = arith.constant 0 : index
    %c0_132 = arith.constant 0 : index
    %677 = vector.load %arg11[%c1_130, %c0_131, %c0_132] : memref<2x4x32xf32, #tpu.memory_space<vmem>>, vector<1x4x32xf32>
    %678 = vector.shape_cast %677 : vector<1x4x32xf32> to vector<4x32xf32>
    %679 = vector.shape_cast %633 : vector<4x32xf32> to vector<1x4x32xf32>
    tpu.vector_store %arg11[%c1_130, %c0_131, %c0_132], %679 {strides = array<i32>} : memref<2x4x32xf32, #tpu.memory_space<vmem>>, vector<1x4x32xf32>,
    return
  }
}

</mosaic_0001>

<llo_original>
// kernel: encoder_forward.1
$region0: #{encoder_forward.1}
  #allocation0 [shape = 'u32[]', space=smem, size = 0x4, offset = 0x4, fixed_abs, tag = 'smem constant byte address 0x4 - core index']
  #allocation1 [shape = 'u32[72,128]{1,0:T(1,128)}', space=vmem, size = 0x9000, scoped, tag = 'internal scratch']
  %s0 = inlined_call_operand.vmem [shape: f32[32,16], index: 0, kind: input, shape index: {}]
  %s1 = inlined_call_operand.vmem [shape: s32[4,1], index: 1, kind: input, shape index: {}]
  %s2 = inlined_call_operand.vmem [shape: f32[16,96], index: 2, kind: input, shape index: {}]
  %s3 = inlined_call_operand.vmem [shape: f32[32,96], index: 3, kind: input, shape index: {}]
  %s4 = inlined_call_operand.vmem [shape: f32[1,96], index: 4, kind: input, shape index: {}]
  %s5 = inlined_call_operand.vmem [shape: f32[1,32], index: 5, kind: input, shape index: {}]
  %s6 = inlined_call_operand.vmem [shape: f32[16,96], index: 6, kind: input, shape index: {}]
  %s7 = inlined_call_operand.vmem [shape: f32[32,96], index: 7, kind: input, shape index: {}]
  %s8 = inlined_call_operand.vmem [shape: f32[1,96], index: 8, kind: input, shape index: {}]
  %s9 = inlined_call_operand.vmem [shape: f32[1,32], index: 9, kind: input, shape index: {}]
  %s10 = inlined_call_operand.hbm [shape: f32[8,4,32], index: 10, kind: output, shape index: {0}]
  %s11 = inlined_call_operand.hbm [shape: f32[2,4,32], index: 11, kind: output, shape index: {1}]
  %12 = xla_tuple %s10, %s11
  %s13 = sld [smem:[#allocation0]]
  $region58: #{encoder_forward.1} parent=0
    _
  %s15 = ssub.s32 1, %s13
  %s16 = scalar_select 0, %s15, %s13
  $region1: #{encoder_forward.1} parent=0
    #allocation2 [shape = 'u8[16384]{0}', space=vmem, size = 0x4000, scoped, tag = 'output window, operand 0, single buffered']
    #allocation3 [shape = 's32[1]{0}', space=sflag, size = 0x4, scoped, tag = 'scoped memory for encoder_forward.1']
    #allocation4 [shape = 'u8[4096]{0}', space=vmem, size = 0x1000, scoped, tag = 'output window, operand 1, single buffered']
    #allocation5 [shape = 's32[1]{0}', space=sflag, size = 0x4, scoped, tag = 'scoped memory for encoder_forward.1']
    %17 = vsyncpa [#allocation3], 0
    %18 = vsyncpa [#allocation5], 0
    // Predicated region
    $region2: #{encoder_forward.1} parent=1 // pred_check
      _
    $region3: #{encoder_forward.1} parent=1 // pred_check_branch
      %20 = sbr.rel (0) target = $region5
    $region4: #{encoder_forward.1} parent=1 // pred_region
      _
    $region5: #{encoder_forward.1} parent=1 // pred_fallthru
      _
    // Predicated region
    $region6: #{encoder_forward.1} parent=1 // pred_check
      _
    $region7: #{encoder_forward.1} parent=1 // pred_check_branch
      %22 = sbr.rel (0) target = $region9
    $region8: #{encoder_forward.1} parent=1 // pred_region
      _
    $region9: #{encoder_forward.1} parent=1 // pred_fallthru
      _
    // Predicated region
    $region10: #{encoder_forward.1} parent=1 // pred_check
      _
    $region11: #{encoder_forward.1} parent=1 // pred_check_branch
      %24 = sbr.rel (0) target = $region13
    $region12: #{encoder_forward.1} parent=1 // pred_region
      _
    $region13: #{encoder_forward.1} parent=1 // pred_fallthru
      _
    // Predicated region
    $region14: #{encoder_forward.1} parent=1 // pred_check
      _
    $region15: #{encoder_forward.1} parent=1 // pred_check_branch
      %26 = sbr.rel (0) target = $region17
    $region16: #{encoder_forward.1} parent=1 // pred_region
      _
    $region17: #{encoder_forward.1} parent=1 // pred_fallthru
      _
    // Predicated region
    $region18: #{encoder_forward.1} parent=1 // pred_check
      _
    $region19: #{encoder_forward.1} parent=1 // pred_check_branch
      %28 = sbr.rel (0) target = $region21
    $region20: #{encoder_forward.1} parent=1 // pred_region
      _
    $region21: #{encoder_forward.1} parent=1 // pred_fallthru
      _
    // Predicated region
    $region22: #{encoder_forward.1} parent=1 // pred_check
      _
    $region23: #{encoder_forward.1} parent=1 // pred_check_branch
      %30 = sbr.rel (0) target = $region25
    $region24: #{encoder_forward.1} parent=1 // pred_region
      _
    $region25: #{encoder_forward.1} parent=1 // pred_fallthru
      _
    // Predicated region
    $region26: #{encoder_forward.1} parent=1 // pred_check
      _
    $region27: #{encoder_forward.1} parent=1 // pred_check_branch
      %32 = sbr.rel (0) target = $region29
    $region28: #{encoder_forward.1} parent=1 // pred_region
      _
    $region29: #{encoder_forward.1} parent=1 // pred_fallthru
      _
    // Predicated region
    $region30: #{encoder_forward.1} parent=1 // pred_check
      _
    $region31: #{encoder_forward.1} parent=1 // pred_check_branch
      %34 = sbr.rel (0) target = $region33
    $region32: #{encoder_forward.1} parent=1 // pred_region
      _
    $region33: #{encoder_forward.1} parent=1 // pred_fallthru
      _
    // Predicated region
    $region34: #{encoder_forward.1} parent=1 // pred_check
      _
    $region35: #{encoder_forward.1} parent=1 // pred_check_branch
      %36 = sbr.rel (0) target = $region37
    $region36: #{encoder_forward.1} parent=1 // pred_region
      _
    $region37: #{encoder_forward.1} parent=1 // pred_fallthru
      _
    // Predicated region
    $region38: #{encoder_forward.1} parent=1 // pred_check
      _
    $region39: #{encoder_forward.1} parent=1 // pred_check_branch
      %38 = sbr.rel (0) target = $region41
    $region40: #{encoder_forward.1} parent=1 // pred_region
      _
    $region41: #{encoder_forward.1} parent=1 // pred_fallthru
      _
    %v39 = vld [vmem:[%s1] sm:$0xf]
    %v40 = vld [vmem:[%s0] sm:$0xff]
    %v41 = vld [vmem:[%s0 + $0x8] sm:$0xff]
    %v42 = vld [vmem:[%s0 + $0x10] sm:$0xff]
    %v43 = vld [vmem:[%s0 + $0x18] sm:$0xff]
    %v44 = vld [vmem:[%s2] sm:$0xff]
    %v45 = vld [vmem:[%s2 + $0x8] sm:$0xff]
    %v46 = vld [vmem:[%s4] sm:$0x1]
    %v48 = vperm.slane %v46, 0
    %vm50 = vcmask 130048
    %v52 = vsel %vm50, %v40, 0
    %v55 = vsel %vm50, %v41, 0
    %v58 = vsel %vm50, %v42, 0
    %v61 = vsel %vm50, %v43, 0
    %63 = vmatpush.msra.mxu0 0.0
    %64 = vmatpush.msra.mxu0 0.0
    %65 = vmatpush.msra.mxu0 0.0
    %66 = vmatpush.msra.mxu0 0.0
    %67 = vmatpush.msra.mxu0 0.0
    %68 = vmatpush.msra.mxu0 0.0
    %69 = vmatpush.msra.mxu0 0.0
    %70 = vmatpush.msra.mxu0 0.0
    %71 = vmatpush.msra.mxu0 0.0
    %72 = vmatpush.msra.mxu0 0.0
    %73 = vmatpush.msra.mxu0 0.0
    %74 = vmatpush.msra.mxu0 0.0
    %75 = vmatpush.msra.mxu0 0.0
    %76 = vmatpush.msra.mxu0 0.0
    %77 = vmatpush.msra.mxu0 %v45
    %78 = vmatpush.msra.mxu0 %v44
    %79 = vmatmul.f32.gmra.mxu0 %v52
    %v80 = vpop.f32.mrf.mxu0
    %v81 = vadd.f32 %v48, %v80
    %82 = vmatmul.f32.gmra.mxu0 %v55
    %v83 = vpop.f32.mrf.mxu0
    %v84 = vadd.f32 %v48, %v83
    %85 = vmatmul.f32.gmra.mxu0 %v58
    %v86 = vpop.f32.mrf.mxu0
    %v87 = vadd.f32 %v48, %v86
    %88 = vmatmul.f32.gmra.mxu0 %v61
    %v89 = vpop.f32.mrf.mxu0
    %v90 = vadd.f32 %v48, %v89
    %91 = vdwg.mxu0
    %v92 = vld [vmem:[%s6] sm:$0xff]
    %v93 = vld [vmem:[%s6 + $0x8] sm:$0xff]
    %v94 = vld [vmem:[%s8] sm:$0x1]
    %v96 = vperm.slane %v94, 0
    %98 = vmatpush.msra.mxu0 0.0
    %99 = vmatpush.msra.mxu0 0.0
    %100 = vmatpush.msra.mxu0 0.0
    %101 = vmatpush.msra.mxu0 0.0
    %102 = vmatpush.msra.mxu0 0.0
    %103 = vmatpush.msra.mxu0 0.0
    %104 = vmatpush.msra.mxu0 0.0
    %105 = vmatpush.msra.mxu0 0.0
    %106 = vmatpush.msra.mxu0 0.0
    %107 = vmatpush.msra.mxu0 0.0
    %108 = vmatpush.msra.mxu0 0.0
    %109 = vmatpush.msra.mxu0 0.0
    %110 = vmatpush.msra.mxu0 0.0
    %111 = vmatpush.msra.mxu0 0.0
    %112 = vmatpush.msra.mxu0 %v93
    %113 = vmatpush.msra.mxu0 %v92
    %114 = vmatmul.f32.gmra.mxu0 %v52
    %v115 = vpop.f32.mrf.mxu0
    %v116 = vadd.f32 %v96, %v115
    %117 = vmatmul.f32.gmra.mxu0 %v55
    %v118 = vpop.f32.mrf.mxu0
    %v119 = vadd.f32 %v96, %v118
    %120 = vmatmul.f32.gmra.mxu0 %v58
    %v121 = vpop.f32.mrf.mxu0
    %v122 = vadd.f32 %v96, %v121
    %123 = vmatmul.f32.gmra.mxu0 %v61
    %v124 = vpop.f32.mrf.mxu0
    %v125 = vadd.f32 %v96, %v124
    %126 = vdwg.mxu0
    %v127 = vld [vmem:[%s3] sm:$0xff]
    %v128 = vld [vmem:[%s3 + $0x8] sm:$0xff]
    %v129 = vld [vmem:[%s3 + $0x10] sm:$0xff]
    %v130 = vld [vmem:[%s3 + $0x18] sm:$0xff]
    %v131 = vld [vmem:[%s7] sm:$0xff]
    %v132 = vld [vmem:[%s7 + $0x8] sm:$0xff]
    %v133 = vld [vmem:[%s7 + $0x10] sm:$0xff]
    %v134 = vld [vmem:[%s7 + $0x18] sm:$0xff]
    %v135 = vld [vmem:[%s5] sm:$0x1]
    %v136 = vld [vmem:[%s9] sm:$0x1]
    %vm137 = vcmask 261120
    %v139 = vsel %vm137, 0.0, 0
    %141 = vmatpush.msra.mxu0 0.0
    %142 = vmatpush.msra.mxu0 0.0
    %143 = vmatpush.msra.mxu0 0.0
    %144 = vmatpush.msra.mxu0 0.0
    %145 = vmatpush.msra.mxu0 0.0
    %146 = vmatpush.msra.mxu0 0.0
    %147 = vmatpush.msra.mxu0 0.0
    %148 = vmatpush.msra.mxu0 0.0
    %149 = vmatpush.msra.mxu0 0.0
    %150 = vmatpush.msra.mxu0 0.0
    %151 = vmatpush.msra.mxu0 0.0
    %152 = vmatpush.msra.mxu0 0.0
    %153 = vmatpush.msra.mxu0 %v130
    %154 = vmatpush.msra.mxu0 %v129
    %155 = vmatpush.msra.mxu0 %v128
    %156 = vmatpush.msra.mxu0 %v127
    %157 = vmatmul.f32.gmra.mxu0 %v139
    %v158 = vpop.f32.mrf.mxu0
    %v159 = vadd.f32 0.0, %v158
    %160 = vdwg.mxu0
    %v161 = vadd.f32 %v81, %v159
    %v162 = vxor.u32 %v161, 2147483648
    %v163 = vmul.f32 %v162, 1.442695
    %v164 = vpow.pop %v163
    %v165 = vadd.f32 %v164, 1.0
    %v166 = vrcp.pop %v165
    %v167 = vmul.f32 %v165, %v166
    %v168 = vsub.f32 1.0, %v167
    %v169 = vmul.f32 %v166, %v168
    %v170 = vadd.f32 %v166, %v169
    %vm171 = vweird.f32 %v165
    %vm172 = vweird.f32 %v166
    %vm173 = vmor %vm171, %vm172
    %v174 = vsel %vm173, %v166, %v170
    %v175 = vand.u32 2147483647, %v165
    %vm176 = vcmp.eq.f32.partialorder %v175, 8.507059e+37
    %v177 = vand.u32 %v165, 2147483648
    %v178 = vor.u32 1.1754944e-38, %v177
    %v179 = vsel %vm176, %v178, %v174
    %v180 = vmul.f32 1.0, %v179
    %v182 = vperm.slane %v135, 0
    %183 = vrot.lane.b32.xlu0 %v182, 64
    %v184 = vpop.permute.xlu0 %183
    %v186 = vadd.f32 %v159, %v184
    %188 = vrot.lane.b32.xlu0 %v186, 64
    %v189 = vpop.permute.xlu0 %188
    %v191 = vmul.f32 %v180, %v189
    %193 = vrot.lane.b32.xlu0 %v191, 64
    %v194 = vpop.permute.xlu0 %193
    %v196 = vadd.f32 %v81, %v194
    %v197 = vtanh.pop %v196
    %v198 = vsub.f32 1.0, %v180
    %200 = vrot.lane.b32.xlu0 %v197, 96
    %v201 = vpop.permute.xlu0 %200
    %v203 = vmul.f32 %v198, %v201
    %v204 = vmul.f32 %v180, 0.0
    %v205 = vadd.f32 %v203, %v204
    %206 = vmatpush.msra.mxu0 0.0
    %207 = vmatpush.msra.mxu0 0.0
    %208 = vmatpush.msra.mxu0 0.0
    %209 = vmatpush.msra.mxu0 0.0
    %210 = vmatpush.msra.mxu0 0.0
    %211 = vmatpush.msra.mxu0 0.0
    %212 = vmatpush.msra.mxu0 0.0
    %213 = vmatpush.msra.mxu0 0.0
    %214 = vmatpush.msra.mxu0 0.0
    %215 = vmatpush.msra.mxu0 0.0
    %216 = vmatpush.msra.mxu0 0.0
    %217 = vmatpush.msra.mxu0 0.0
    %218 = vmatpush.msra.mxu0 %v134
    %219 = vmatpush.msra.mxu0 %v133
    %220 = vmatpush.msra.mxu0 %v132
    %221 = vmatpush.msra.mxu0 %v131
    %222 = vmatmul.f32.gmra.mxu0 %v139
    %v223 = vpop.f32.mrf.mxu0
    %v224 = vadd.f32 0.0, %v223
    %225 = vdwg.mxu0
    %v227 = vrot.slane %v224, 4
    %v229 = vadd.f32 %v125, %v227
    %v230 = vxor.u32 %v229, 2147483648
    %v231 = vmul.f32 %v230, 1.442695
    %v232 = vpow.pop %v231
    %v233 = vadd.f32 %v232, 1.0
    %v234 = vrcp.pop %v233
    %v235 = vmul.f32 %v233, %v234
    %v236 = vsub.f32 1.0, %v235
    %v237 = vmul.f32 %v234, %v236
    %v238 = vadd.f32 %v234, %v237
    %vm239 = vweird.f32 %v233
    %vm240 = vweird.f32 %v234
    %vm241 = vmor %vm239, %vm240
    %v242 = vsel %vm241, %v234, %v238
    %v243 = vand.u32 2147483647, %v233
    %vm244 = vcmp.eq.f32.partialorder %v243, 8.507059e+37
    %v245 = vand.u32 %v233, 2147483648
    %v246 = vor.u32 1.1754944e-38, %v245
    %v247 = vsel %vm244, %v246, %v242
    %v248 = vmul.f32 1.0, %v247
    %v250 = vperm.slane %v136, 0
    %251 = vrot.lane.b32.xlu0 %v250, 64
    %v252 = vpop.permute.xlu0 %251
    %v254 = vadd.f32 %v224, %v252
    %v256 = vrot.slane %v254, 4
    %257 = vrot.lane.b32.xlu0 %v256, 64
    %v258 = vpop.permute.xlu0 %257
    %v260 = vmul.f32 %v248, %v258
    %262 = vrot.lane.b32.xlu0 %v260, 64
    %v263 = vpop.permute.xlu0 %262
    %v265 = vadd.f32 %v125, %v263
    %v266 = vtanh.pop %v265
    %v267 = vsub.f32 1.0, %v248
    %269 = vrot.lane.b32.xlu0 %v266, 96
    %v270 = vpop.permute.xlu0 %269
    %v272 = vmul.f32 %v267, %v270
    %v273 = vmul.f32 %v248, 0.0
    %v274 = vadd.f32 %v272, %v273
    %vm275 = vcmp.gt.s32.totalorder %v39, 0
    %vm276 = vcmp.gt.s32.totalorder %v39, 7
    %v277 = vsel %vm275, 1, 0
    %278 = vset.pattern.permute.xlu0 0
    %279 = vperm.xlu0 %278, %v277
    %v280 = vpop.permute.xlu0 %279
    %vm281 = vcmp.eq.s32.totalorder %v280, 1
    %v282 = vsel %vm281, %v205, 0.0
    %v283 = vsel %vm276, 1, 0
    %284 = vset.pattern.permute.xlu0 0
    %285 = vperm.xlu0 %284, %v283
    %v286 = vpop.permute.xlu0 %285
    %vm287 = vcmp.eq.s32.totalorder %v286, 1
    %v289 = vrot.slane %v274, 4
    %290 = vrot.lane.b32.xlu0 %v289, 96
    %v291 = vpop.permute.xlu0 %290
    %v293 = vsel %vm287, %v291, 0.0
    %295 = vrot.lane.b32.xlu0 %v282, 96
    %v296 = vpop.permute.xlu0 %295
    %v297 = vsel %vm137, %v296, 0
    %299 = vmatpush.msra.mxu0 0.0
    %300 = vmatpush.msra.mxu0 0.0
    %301 = vmatpush.msra.mxu0 0.0
    %302 = vmatpush.msra.mxu0 0.0
    %303 = vmatpush.msra.mxu0 0.0
    %304 = vmatpush.msra.mxu0 0.0
    %305 = vmatpush.msra.mxu0 0.0
    %306 = vmatpush.msra.mxu0 0.0
    %307 = vmatpush.msra.mxu0 0.0
    %308 = vmatpush.msra.mxu0 0.0
    %309 = vmatpush.msra.mxu0 0.0
    %310 = vmatpush.msra.mxu0 0.0
    %311 = vmatpush.msra.mxu0 %v130
    %312 = vmatpush.msra.mxu0 %v129
    %313 = vmatpush.msra.mxu0 %v128
    %314 = vmatpush.msra.mxu0 %v127
    %315 = vmatmul.f32.gmra.mxu0 %v297
    %v316 = vpop.f32.mrf.mxu0
    %v317 = vadd.f32 0.0, %v316
    %318 = vdwg.mxu0
    %v320 = vrot.slane %v317, 4
    %v322 = vadd.f32 %v81, %v320
    %v323 = vxor.u32 %v322, 2147483648
    %v324 = vmul.f32 %v323, 1.442695
    %v325 = vpow.pop %v324
    %v326 = vadd.f32 %v325, 1.0
    %v327 = vrcp.pop %v326
    %v328 = vmul.f32 %v326, %v327
    %v329 = vsub.f32 1.0, %v328
    %v330 = vmul.f32 %v327, %v329
    %v331 = vadd.f32 %v327, %v330
    %vm332 = vweird.f32 %v326
    %vm333 = vweird.f32 %v327
    %vm334 = vmor %vm332, %vm333
    %v335 = vsel %vm334, %v327, %v331
    %v336 = vand.u32 2147483647, %v326
    %vm337 = vcmp.eq.f32.partialorder %v336, 8.507059e+37
    %v338 = vand.u32 %v326, 2147483648
    %v339 = vor.u32 1.1754944e-38, %v338
    %v340 = vsel %vm337, %v339, %v335
    %v341 = vmul.f32 1.0, %v340
    %v342 = vadd.f32 %v317, %v184
    %v344 = vrot.slane %v342, 4
    %345 = vrot.lane.b32.xlu0 %v344, 64
    %v346 = vpop.permute.xlu0 %345
    %v348 = vmul.f32 %v341, %v346
    %350 = vrot.lane.b32.xlu0 %v348, 64
    %v351 = vpop.permute.xlu0 %350
    %v353 = vadd.f32 %v81, %v351
    %v354 = vtanh.pop %v353
    %v355 = vsub.f32 1.0, %v341
    %357 = vrot.lane.b32.xlu0 %v354, 96
    %v358 = vpop.permute.xlu0 %357
    %v360 = vmul.f32 %v355, %v358
    %v361 = vrot.slane %v282, 4
    %v363 = vmul.f32 %v341, %v361
    %v364 = vadd.f32 %v360, %v363
    %v366 = vsel %vm137, %v293, 0
    %368 = vmatpush.msra.mxu0 0.0
    %369 = vmatpush.msra.mxu0 0.0
    %370 = vmatpush.msra.mxu0 0.0
    %371 = vmatpush.msra.mxu0 0.0
    %372 = vmatpush.msra.mxu0 0.0
    %373 = vmatpush.msra.mxu0 0.0
    %374 = vmatpush.msra.mxu0 0.0
    %375 = vmatpush.msra.mxu0 0.0
    %376 = vmatpush.msra.mxu0 0.0
    %377 = vmatpush.msra.mxu0 0.0
    %378 = vmatpush.msra.mxu0 0.0
    %379 = vmatpush.msra.mxu0 0.0
    %380 = vmatpush.msra.mxu0 %v134
    %381 = vmatpush.msra.mxu0 %v133
    %382 = vmatpush.msra.mxu0 %v132
    %383 = vmatpush.msra.mxu0 %v131
    %384 = vmatmul.f32.gmra.mxu0 %v366
    %v385 = vpop.f32.mrf.mxu0
    %v386 = vadd.f32 0.0, %v385
    %387 = vdwg.mxu0
    %v388 = vadd.f32 %v125, %v386
    %v389 = vxor.u32 %v388, 2147483648
    %v390 = vmul.f32 %v389, 1.442695
    %v391 = vpow.pop %v390
    %v392 = vadd.f32 %v391, 1.0
    %v393 = vrcp.pop %v392
    %v394 = vmul.f32 %v392, %v393
    %v395 = vsub.f32 1.0, %v394
    %v396 = vmul.f32 %v393, %v395
    %v397 = vadd.f32 %v393, %v396
    %vm398 = vweird.f32 %v392
    %vm399 = vweird.f32 %v393
    %vm400 = vmor %vm398, %vm399
    %v401 = vsel %vm400, %v393, %v397
    %v402 = vand.u32 2147483647, %v392
    %vm403 = vcmp.eq.f32.partialorder %v402, 8.507059e+37
    %v404 = vand.u32 %v392, 2147483648
    %v405 = vor.u32 1.1754944e-38, %v404
    %v406 = vsel %vm403, %v405, %v401
    %v407 = vmul.f32 1.0, %v406
    %v408 = vadd.f32 %v386, %v252
    %410 = vrot.lane.b32.xlu0 %v408, 64
    %v411 = vpop.permute.xlu0 %410
    %v413 = vmul.f32 %v407, %v411
    %415 = vrot.lane.b32.xlu0 %v413, 64
    %v416 = vpop.permute.xlu0 %415
    %v418 = vadd.f32 %v125, %v416
    %v419 = vtanh.pop %v418
    %v420 = vsub.f32 1.0, %v407
    %422 = vrot.lane.b32.xlu0 %v419, 96
    %v423 = vpop.permute.xlu0 %422
    %v425 = vmul.f32 %v420, %v423
    %426 = vrot.lane.b32.xlu0 %v293, 32
    %v427 = vpop.permute.xlu0 %426
    %v429 = vmul.f32 %v407, %v427
    %v430 = vadd.f32 %v425, %v429
    %vm431 = vcmp.gt.s32.totalorder %v39, 1
    %vm432 = vcmp.gt.s32.totalorder %v39, 6
    %v433 = vsel %vm431, 1, 0
    %434 = vset.pattern.permute.xlu0 0
    %435 = vperm.xlu0 %434, %v433
    %v436 = vpop.permute.xlu0 %435
    %vm437 = vcmp.eq.s32.totalorder %v436, 1
    %v439 = vrot.slane %v364, 4
    %440 = vrot.lane.b32.xlu0 %v439, 96
    %v441 = vpop.permute.xlu0 %440
    %v444 = vsel %vm437, %v441, %v296
    %v445 = vsel %vm432, 1, 0
    %446 = vset.pattern.permute.xlu0 0
    %447 = vperm.xlu0 %446, %v445
    %v448 = vpop.permute.xlu0 %447
    %vm449 = vcmp.eq.s32.totalorder %v448, 1
    %v450 = vsel %vm449, %v430, %v427
    %v451 = vsel %vm437, %v441, 0.0
    %v452 = vsel %vm449, %v430, 0.0
    %v454 = vsel %vm137, %v444, 0
    %456 = vmatpush.msra.mxu0 0.0
    %457 = vmatpush.msra.mxu0 0.0
    %458 = vmatpush.msra.mxu0 0.0
    %459 = vmatpush.msra.mxu0 0.0
    %460 = vmatpush.msra.mxu0 0.0
    %461 = vmatpush.msra.mxu0 0.0
    %462 = vmatpush.msra.mxu0 0.0
    %463 = vmatpush.msra.mxu0 0.0
    %464 = vmatpush.msra.mxu0 0.0
    %465 = vmatpush.msra.mxu0 0.0
    %466 = vmatpush.msra.mxu0 0.0
    %467 = vmatpush.msra.mxu0 0.0
    %468 = vmatpush.msra.mxu0 %v130
    %469 = vmatpush.msra.mxu0 %v129
    %470 = vmatpush.msra.mxu0 %v128
    %471 = vmatpush.msra.mxu0 %v127
    %472 = vmatmul.f32.gmra.mxu0 %v454
    %v473 = vpop.f32.mrf.mxu0
    %v474 = vadd.f32 0.0, %v473
    %475 = vdwg.mxu0
    %v476 = vadd.f32 %v84, %v474
    %v477 = vxor.u32 %v476, 2147483648
    %v478 = vmul.f32 %v477, 1.442695
    %v479 = vpow.pop %v478
    %v480 = vadd.f32 %v479, 1.0
    %v481 = vrcp.pop %v480
    %v482 = vmul.f32 %v480, %v481
    %v483 = vsub.f32 1.0, %v482
    %v484 = vmul.f32 %v481, %v483
    %v485 = vadd.f32 %v481, %v484
    %vm486 = vweird.f32 %v480
    %vm487 = vweird.f32 %v481
    %vm488 = vmor %vm486, %vm487
    %v489 = vsel %vm488, %v481, %v485
    %v490 = vand.u32 2147483647, %v480
    %vm491 = vcmp.eq.f32.partialorder %v490, 8.507059e+37
    %v492 = vand.u32 %v480, 2147483648
    %v493 = vor.u32 1.1754944e-38, %v492
    %v494 = vsel %vm491, %v493, %v489
    %v495 = vmul.f32 1.0, %v494
    %v496 = vadd.f32 %v474, %v184
    %498 = vrot.lane.b32.xlu0 %v496, 64
    %v499 = vpop.permute.xlu0 %498
    %v501 = vmul.f32 %v495, %v499
    %503 = vrot.lane.b32.xlu0 %v501, 64
    %v504 = vpop.permute.xlu0 %503
    %v506 = vadd.f32 %v84, %v504
    %v507 = vtanh.pop %v506
    %v508 = vsub.f32 1.0, %v495
    %510 = vrot.lane.b32.xlu0 %v507, 96
    %v511 = vpop.permute.xlu0 %510
    %v513 = vmul.f32 %v508, %v511
    %514 = vrot.lane.b32.xlu0 %v444, 32
    %v515 = vpop.permute.xlu0 %514
    %v517 = vmul.f32 %v495, %v515
    %v518 = vadd.f32 %v513, %v517
    %520 = vrot.lane.b32.xlu0 %v450, 96
    %v521 = vpop.permute.xlu0 %520
    %v522 = vsel %vm137, %v521, 0
    %524 = vmatpush.msra.mxu0 0.0
    %525 = vmatpush.msra.mxu0 0.0
    %526 = vmatpush.msra.mxu0 0.0
    %527 = vmatpush.msra.mxu0 0.0
    %528 = vmatpush.msra.mxu0 0.0
    %529 = vmatpush.msra.mxu0 0.0
    %530 = vmatpush.msra.mxu0 0.0
    %531 = vmatpush.msra.mxu0 0.0
    %532 = vmatpush.msra.mxu0 0.0
    %533 = vmatpush.msra.mxu0 0.0
    %534 = vmatpush.msra.mxu0 0.0
    %535 = vmatpush.msra.mxu0 0.0
    %536 = vmatpush.msra.mxu0 %v134
    %537 = vmatpush.msra.mxu0 %v133
    %538 = vmatpush.msra.mxu0 %v132
    %539 = vmatpush.msra.mxu0 %v131
    %540 = vmatmul.f32.gmra.mxu0 %v522
    %v541 = vpop.f32.mrf.mxu0
    %v542 = vadd.f32 0.0, %v541
    %543 = vdwg.mxu0
    %v545 = vrot.slane %v542, 4
    %v547 = vadd.f32 %v122, %v545
    %v548 = vxor.u32 %v547, 2147483648
    %v549 = vmul.f32 %v548, 1.442695
    %v550 = vpow.pop %v549
    %v551 = vadd.f32 %v550, 1.0
    %v552 = vrcp.pop %v551
    %v553 = vmul.f32 %v551, %v552
    %v554 = vsub.f32 1.0, %v553
    %v555 = vmul.f32 %v552, %v554
    %v556 = vadd.f32 %v552, %v555
    %vm557 = vweird.f32 %v551
    %vm558 = vweird.f32 %v552
    %vm559 = vmor %vm557, %vm558
    %v560 = vsel %vm559, %v552, %v556
    %v561 = vand.u32 2147483647, %v551
    %vm562 = vcmp.eq.f32.partialorder %v561, 8.507059e+37
    %v563 = vand.u32 %v551, 2147483648
    %v564 = vor.u32 1.1754944e-38, %v563
    %v565 = vsel %vm562, %v564, %v560
    %v566 = vmul.f32 1.0, %v565
    %v567 = vadd.f32 %v542, %v252
    %v569 = vrot.slane %v567, 4
    %570 = vrot.lane.b32.xlu0 %v569, 64
    %v571 = vpop.permute.xlu0 %570
    %v573 = vmul.f32 %v566, %v571
    %575 = vrot.lane.b32.xlu0 %v573, 64
    %v576 = vpop.permute.xlu0 %575
    %v578 = vadd.f32 %v122, %v576
    %v579 = vtanh.pop %v578
    %v580 = vsub.f32 1.0, %v566
    %582 = vrot.lane.b32.xlu0 %v579, 96
    %v583 = vpop.permute.xlu0 %582
    %v585 = vmul.f32 %v580, %v583
    %v586 = vrot.slane %v450, 4
    %v588 = vmul.f32 %v566, %v586
    %v589 = vadd.f32 %v585, %v588
    %vm590 = vcmp.gt.s32.totalorder %v39, 2
    %vm591 = vcmp.gt.s32.totalorder %v39, 5
    %v592 = vsel %vm590, 1, 0
    %593 = vset.pattern.permute.xlu0 0
    %594 = vperm.xlu0 %593, %v592
    %v595 = vpop.permute.xlu0 %594
    %vm596 = vcmp.eq.s32.totalorder %v595, 1
    %v597 = vsel %vm596, %v518, %v515
    %v598 = vsel %vm591, 1, 0
    %599 = vset.pattern.permute.xlu0 0
    %600 = vperm.xlu0 %599, %v598
    %v601 = vpop.permute.xlu0 %600
    %vm602 = vcmp.eq.s32.totalorder %v601, 1
    %v604 = vrot.slane %v589, 4
    %605 = vrot.lane.b32.xlu0 %v604, 96
    %v606 = vpop.permute.xlu0 %605
    %v609 = vsel %vm602, %v606, %v521
    %v610 = vsel %vm596, %v518, 0.0
    %v611 = vsel %vm602, %v606, 0.0
    %613 = vrot.lane.b32.xlu0 %v597, 96
    %v614 = vpop.permute.xlu0 %613
    %v615 = vsel %vm137, %v614, 0
    %617 = vmatpush.msra.mxu0 0.0
    %618 = vmatpush.msra.mxu0 0.0
    %619 = vmatpush.msra.mxu0 0.0
    %620 = vmatpush.msra.mxu0 0.0
    %621 = vmatpush.msra.mxu0 0.0
    %622 = vmatpush.msra.mxu0 0.0
    %623 = vmatpush.msra.mxu0 0.0
    %624 = vmatpush.msra.mxu0 0.0
    %625 = vmatpush.msra.mxu0 0.0
    %626 = vmatpush.msra.mxu0 0.0
    %627 = vmatpush.msra.mxu0 0.0
    %628 = vmatpush.msra.mxu0 0.0
    %629 = vmatpush.msra.mxu0 %v130
    %630 = vmatpush.msra.mxu0 %v129
    %631 = vmatpush.msra.mxu0 %v128
    %632 = vmatpush.msra.mxu0 %v127
    %633 = vmatmul.f32.gmra.mxu0 %v615
    %v634 = vpop.f32.mrf.mxu0
    %v635 = vadd.f32 0.0, %v634
    %636 = vdwg.mxu0
    %v638 = vrot.slane %v635, 4
    %v640 = vadd.f32 %v84, %v638
    %v641 = vxor.u32 %v640, 2147483648
    %v642 = vmul.f32 %v641, 1.442695
    %v643 = vpow.pop %v642
    %v644 = vadd.f32 %v643, 1.0
    %v645 = vrcp.pop %v644
    %v646 = vmul.f32 %v644, %v645
    %v647 = vsub.f32 1.0, %v646
    %v648 = vmul.f32 %v645, %v647
    %v649 = vadd.f32 %v645, %v648
    %vm650 = vweird.f32 %v644
    %vm651 = vweird.f32 %v645
    %vm652 = vmor %vm650, %vm651
    %v653 = vsel %vm652, %v645, %v649
    %v654 = vand.u32 2147483647, %v644
    %vm655 = vcmp.eq.f32.partialorder %v654, 8.507059e+37
    %v656 = vand.u32 %v644, 2147483648
    %v657 = vor.u32 1.1754944e-38, %v656
    %v658 = vsel %vm655, %v657, %v653
    %v659 = vmul.f32 1.0, %v658
    %v660 = vadd.f32 %v635, %v184
    %v662 = vrot.slane %v660, 4
    %663 = vrot.lane.b32.xlu0 %v662, 64
    %v664 = vpop.permute.xlu0 %663
    %v666 = vmul.f32 %v659, %v664
    %668 = vrot.lane.b32.xlu0 %v666, 64
    %v669 = vpop.permute.xlu0 %668
    %v671 = vadd.f32 %v84, %v669
    %v672 = vtanh.pop %v671
    %v673 = vsub.f32 1.0, %v659
    %675 = vrot.lane.b32.xlu0 %v672, 96
    %v676 = vpop.permute.xlu0 %675
    %v678 = vmul.f32 %v673, %v676
    %v679 = vrot.slane %v597, 4
    %v681 = vmul.f32 %v659, %v679
    %v682 = vadd.f32 %v678, %v681
    %v684 = vsel %vm137, %v609, 0
    %686 = vmatpush.msra.mxu0 0.0
    %687 = vmatpush.msra.mxu0 0.0
    %688 = vmatpush.msra.mxu0 0.0
    %689 = vmatpush.msra.mxu0 0.0
    %690 = vmatpush.msra.mxu0 0.0
    %691 = vmatpush.msra.mxu0 0.0
    %692 = vmatpush.msra.mxu0 0.0
    %693 = vmatpush.msra.mxu0 0.0
    %694 = vmatpush.msra.mxu0 0.0
    %695 = vmatpush.msra.mxu0 0.0
    %696 = vmatpush.msra.mxu0 0.0
    %697 = vmatpush.msra.mxu0 0.0
    %698 = vmatpush.msra.mxu0 %v134
    %699 = vmatpush.msra.mxu0 %v133
    %700 = vmatpush.msra.mxu0 %v132
    %701 = vmatpush.msra.mxu0 %v131
    %702 = vmatmul.f32.gmra.mxu0 %v684
    %v703 = vpop.f32.mrf.mxu0
    %v704 = vadd.f32 0.0, %v703
    %705 = vdwg.mxu0
    %v706 = vadd.f32 %v122, %v704
    %v707 = vxor.u32 %v706, 2147483648
    %v708 = vmul.f32 %v707, 1.442695
    %v709 = vpow.pop %v708
    %v710 = vadd.f32 %v709, 1.0
    %v711 = vrcp.pop %v710
    %v712 = vmul.f32 %v710, %v711
    %v713 = vsub.f32 1.0, %v712
    %v714 = vmul.f32 %v711, %v713
    %v715 = vadd.f32 %v711, %v714
    %vm716 = vweird.f32 %v710
    %vm717 = vweird.f32 %v711
    %vm718 = vmor %vm716, %vm717
    %v719 = vsel %vm718, %v711, %v715
    %v720 = vand.u32 2147483647, %v710
    %vm721 = vcmp.eq.f32.partialorder %v720, 8.507059e+37
    %v722 = vand.u32 %v710, 2147483648
    %v723 = vor.u32 1.1754944e-38, %v722
    %v724 = vsel %vm721, %v723, %v719
    %v725 = vmul.f32 1.0, %v724
    %v726 = vadd.f32 %v704, %v252
    %728 = vrot.lane.b32.xlu0 %v726, 64
    %v729 = vpop.permute.xlu0 %728
    %v731 = vmul.f32 %v725, %v729
    %733 = vrot.lane.b32.xlu0 %v731, 64
    %v734 = vpop.permute.xlu0 %733
    %v736 = vadd.f32 %v122, %v734
    %v737 = vtanh.pop %v736
    %v738 = vsub.f32 1.0, %v725
    %740 = vrot.lane.b32.xlu0 %v737, 96
    %v741 = vpop.permute.xlu0 %740
    %v743 = vmul.f32 %v738, %v741
    %744 = vrot.lane.b32.xlu0 %v609, 32
    %v745 = vpop.permute.xlu0 %744
    %v747 = vmul.f32 %v725, %v745
    %v748 = vadd.f32 %v743, %v747
    %vm749 = vcmp.gt.s32.totalorder %v39, 3
    %vm750 = vcmp.gt.s32.totalorder %v39, 4
    %v751 = vsel %vm749, 1, 0
    %752 = vset.pattern.permute.xlu0 0
    %753 = vperm.xlu0 %752, %v751
    %v754 = vpop.permute.xlu0 %753
    %vm755 = vcmp.eq.s32.totalorder %v754, 1
    %v757 = vrot.slane %v682, 4
    %758 = vrot.lane.b32.xlu0 %v757, 96
    %v759 = vpop.permute.xlu0 %758
    %v762 = vsel %vm755, %v759, %v614
    %v763 = vsel %vm750, 1, 0
    %764 = vset.pattern.permute.xlu0 0
    %765 = vperm.xlu0 %764, %v763
    %v766 = vpop.permute.xlu0 %765
    %vm767 = vcmp.eq.s32.totalorder %v766, 1
    %v768 = vsel %vm767, %v748, %v745
    %v769 = vsel %vm755, %v759, 0.0
    %v770 = vsel %vm767, %v748, 0.0
    %v772 = vsel %vm137, %v762, 0
    %774 = vmatpush.msra.mxu0 0.0
    %775 = vmatpush.msra.mxu0 0.0
    %776 = vmatpush.msra.mxu0 0.0
    %777 = vmatpush.msra.mxu0 0.0
    %778 = vmatpush.msra.mxu0 0.0
    %779 = vmatpush.msra.mxu0 0.0
    %780 = vmatpush.msra.mxu0 0.0
    %781 = vmatpush.msra.mxu0 0.0
    %782 = vmatpush.msra.mxu0 0.0
    %783 = vmatpush.msra.mxu0 0.0
    %784 = vmatpush.msra.mxu0 0.0
    %785 = vmatpush.msra.mxu0 0.0
    %786 = vmatpush.msra.mxu0 %v130
    %787 = vmatpush.msra.mxu0 %v129
    %788 = vmatpush.msra.mxu0 %v128
    %789 = vmatpush.msra.mxu0 %v127
    %790 = vmatmul.f32.gmra.mxu0 %v772
    %v791 = vpop.f32.mrf.mxu0
    %v792 = vadd.f32 0.0, %v791
    %793 = vdwg.mxu0
    %v794 = vadd.f32 %v87, %v792
    %v795 = vxor.u32 %v794, 2147483648
    %v796 = vmul.f32 %v795, 1.442695
    %v797 = vpow.pop %v796
    %v798 = vadd.f32 %v797, 1.0
    %v799 = vrcp.pop %v798
    %v800 = vmul.f32 %v798, %v799
    %v801 = vsub.f32 1.0, %v800
    %v802 = vmul.f32 %v799, %v801
    %v803 = vadd.f32 %v799, %v802
    %vm804 = vweird.f32 %v798
    %vm805 = vweird.f32 %v799
    %vm806 = vmor %vm804, %vm805
    %v807 = vsel %vm806, %v799, %v803
    %v808 = vand.u32 2147483647, %v798
    %vm809 = vcmp.eq.f32.partialorder %v808, 8.507059e+37
    %v810 = vand.u32 %v798, 2147483648
    %v811 = vor.u32 1.1754944e-38, %v810
    %v812 = vsel %vm809, %v811, %v807
    %v813 = vmul.f32 1.0, %v812
    %v814 = vadd.f32 %v792, %v184
    %816 = vrot.lane.b32.xlu0 %v814, 64
    %v817 = vpop.permute.xlu0 %816
    %v819 = vmul.f32 %v813, %v817
    %821 = vrot.lane.b32.xlu0 %v819, 64
    %v822 = vpop.permute.xlu0 %821
    %v824 = vadd.f32 %v87, %v822
    %v825 = vtanh.pop %v824
    %v826 = vsub.f32 1.0, %v813
    %828 = vrot.lane.b32.xlu0 %v825, 96
    %v829 = vpop.permute.xlu0 %828
    %v831 = vmul.f32 %v826, %v829
    %832 = vrot.lane.b32.xlu0 %v762, 32
    %v833 = vpop.permute.xlu0 %832
    %v835 = vmul.f32 %v813, %v833
    %v836 = vadd.f32 %v831, %v835
    %838 = vrot.lane.b32.xlu0 %v768, 96
    %v839 = vpop.permute.xlu0 %838
    %v840 = vsel %vm137, %v839, 0
    %842 = vmatpush.msra.mxu0 0.0
    %843 = vmatpush.msra.mxu0 0.0
    %844 = vmatpush.msra.mxu0 0.0
    %845 = vmatpush.msra.mxu0 0.0
    %846 = vmatpush.msra.mxu0 0.0
    %847 = vmatpush.msra.mxu0 0.0
    %848 = vmatpush.msra.mxu0 0.0
    %849 = vmatpush.msra.mxu0 0.0
    %850 = vmatpush.msra.mxu0 0.0
    %851 = vmatpush.msra.mxu0 0.0
    %852 = vmatpush.msra.mxu0 0.0
    %853 = vmatpush.msra.mxu0 0.0
    %854 = vmatpush.msra.mxu0 %v134
    %855 = vmatpush.msra.mxu0 %v133
    %856 = vmatpush.msra.mxu0 %v132
    %857 = vmatpush.msra.mxu0 %v131
    %858 = vmatmul.f32.gmra.mxu0 %v840
    %v859 = vpop.f32.mrf.mxu0
    %v860 = vadd.f32 0.0, %v859
    %861 = vdwg.mxu0
    %v863 = vrot.slane %v860, 4
    %v865 = vadd.f32 %v119, %v863
    %v866 = vxor.u32 %v865, 2147483648
    %v867 = vmul.f32 %v866, 1.442695
    %v868 = vpow.pop %v867
    %v869 = vadd.f32 %v868, 1.0
    %v870 = vrcp.pop %v869
    %v871 = vmul.f32 %v869, %v870
    %v872 = vsub.f32 1.0, %v871
    %v873 = vmul.f32 %v870, %v872
    %v874 = vadd.f32 %v870, %v873
    %vm875 = vweird.f32 %v869
    %vm876 = vweird.f32 %v870
    %vm877 = vmor %vm875, %vm876
    %v878 = vsel %vm877, %v870, %v874
    %v879 = vand.u32 2147483647, %v869
    %vm880 = vcmp.eq.f32.partialorder %v879, 8.507059e+37
    %v881 = vand.u32 %v869, 2147483648
    %v882 = vor.u32 1.1754944e-38, %v881
    %v883 = vsel %vm880, %v882, %v878
    %v884 = vmul.f32 1.0, %v883
    %v885 = vadd.f32 %v860, %v252
    %v887 = vrot.slane %v885, 4
    %888 = vrot.lane.b32.xlu0 %v887, 64
    %v889 = vpop.permute.xlu0 %888
    %v891 = vmul.f32 %v884, %v889
    %893 = vrot.lane.b32.xlu0 %v891, 64
    %v894 = vpop.permute.xlu0 %893
    %v896 = vadd.f32 %v119, %v894
    %v897 = vtanh.pop %v896
    %v898 = vsub.f32 1.0, %v884
    %900 = vrot.lane.b32.xlu0 %v897, 96
    %v901 = vpop.permute.xlu0 %900
    %v903 = vmul.f32 %v898, %v901
    %v904 = vrot.slane %v768, 4
    %v906 = vmul.f32 %v884, %v904
    %v907 = vadd.f32 %v903, %v906
    %v908 = vsel %vm767, %v836, %v833
    %v910 = vrot.slane %v907, 4
    %911 = vrot.lane.b32.xlu0 %v910, 96
    %v912 = vpop.permute.xlu0 %911
    %v915 = vsel %vm755, %v912, %v839
    %v916 = vsel %vm767, %v836, 0.0
    %v917 = vsel %vm755, %v912, 0.0
    %919 = vrot.lane.b32.xlu0 %v908, 96
    %v920 = vpop.permute.xlu0 %919
    %v921 = vsel %vm137, %v920, 0
    %923 = vmatpush.msra.mxu0 0.0
    %924 = vmatpush.msra.mxu0 0.0
    %925 = vmatpush.msra.mxu0 0.0
    %926 = vmatpush.msra.mxu0 0.0
    %927 = vmatpush.msra.mxu0 0.0
    %928 = vmatpush.msra.mxu0 0.0
    %929 = vmatpush.msra.mxu0 0.0
    %930 = vmatpush.msra.mxu0 0.0
    %931 = vmatpush.msra.mxu0 0.0
    %932 = vmatpush.msra.mxu0 0.0
    %933 = vmatpush.msra.mxu0 0.0
    %934 = vmatpush.msra.mxu0 0.0
    %935 = vmatpush.msra.mxu0 %v130
    %936 = vmatpush.msra.mxu0 %v129
    %937 = vmatpush.msra.mxu0 %v128
    %938 = vmatpush.msra.mxu0 %v127
    %939 = vmatmul.f32.gmra.mxu0 %v921
    %v940 = vpop.f32.mrf.mxu0
    %v941 = vadd.f32 0.0, %v940
    %942 = vdwg.mxu0
    %v944 = vrot.slane %v941, 4
    %v946 = vadd.f32 %v87, %v944
    %v947 = vxor.u32 %v946, 2147483648
    %v948 = vmul.f32 %v947, 1.442695
    %v949 = vpow.pop %v948
    %v950 = vadd.f32 %v949, 1.0
    %v951 = vrcp.pop %v950
    %v952 = vmul.f32 %v950, %v951
    %v953 = vsub.f32 1.0, %v952
    %v954 = vmul.f32 %v951, %v953
    %v955 = vadd.f32 %v951, %v954
    %vm956 = vweird.f32 %v950
    %vm957 = vweird.f32 %v951
    %vm958 = vmor %vm956, %vm957
    %v959 = vsel %vm958, %v951, %v955
    %v960 = vand.u32 2147483647, %v950
    %vm961 = vcmp.eq.f32.partialorder %v960, 8.507059e+37
    %v962 = vand.u32 %v950, 2147483648
    %v963 = vor.u32 1.1754944e-38, %v962
    %v964 = vsel %vm961, %v963, %v959
    %v965 = vmul.f32 1.0, %v964
    %v966 = vadd.f32 %v941, %v184
    %v968 = vrot.slane %v966, 4
    %969 = vrot.lane.b32.xlu0 %v968, 64
    %v970 = vpop.permute.xlu0 %969
    %v972 = vmul.f32 %v965, %v970
    %974 = vrot.lane.b32.xlu0 %v972, 64
    %v975 = vpop.permute.xlu0 %974
    %v977 = vadd.f32 %v87, %v975
    %v978 = vtanh.pop %v977
    %v979 = vsub.f32 1.0, %v965
    %981 = vrot.lane.b32.xlu0 %v978, 96
    %v982 = vpop.permute.xlu0 %981
    %v984 = vmul.f32 %v979, %v982
    %v985 = vrot.slane %v908, 4
    %v987 = vmul.f32 %v965, %v985
    %v988 = vadd.f32 %v984, %v987
    %v990 = vsel %vm137, %v915, 0
    %992 = vmatpush.msra.mxu0 0.0
    %993 = vmatpush.msra.mxu0 0.0
    %994 = vmatpush.msra.mxu0 0.0
    %995 = vmatpush.msra.mxu0 0.0
    %996 = vmatpush.msra.mxu0 0.0
    %997 = vmatpush.msra.mxu0 0.0
    %998 = vmatpush.msra.mxu0 0.0
    %999 = vmatpush.msra.mxu0 0.0
    %1000 = vmatpush.msra.mxu0 0.0
    %1001 = vmatpush.msra.mxu0 0.0
    %1002 = vmatpush.msra.mxu0 0.0
    %1003 = vmatpush.msra.mxu0 0.0
    %1004 = vmatpush.msra.mxu0 %v134
    %1005 = vmatpush.msra.mxu0 %v133
    %1006 = vmatpush.msra.mxu0 %v132
    %1007 = vmatpush.msra.mxu0 %v131
    %1008 = vmatmul.f32.gmra.mxu0 %v990
    %v1009 = vpop.f32.mrf.mxu0
    %v1010 = vadd.f32 0.0, %v1009
    %1011 = vdwg.mxu0
    %v1012 = vadd.f32 %v119, %v1010
    %v1013 = vxor.u32 %v1012, 2147483648
    %v1014 = vmul.f32 %v1013, 1.442695
    %v1015 = vpow.pop %v1014
    %v1016 = vadd.f32 %v1015, 1.0
    %v1017 = vrcp.pop %v1016
    %v1018 = vmul.f32 %v1016, %v1017
    %v1019 = vsub.f32 1.0, %v1018
    %v1020 = vmul.f32 %v1017, %v1019
    %v1021 = vadd.f32 %v1017, %v1020
    %vm1022 = vweird.f32 %v1016
    %vm1023 = vweird.f32 %v1017
    %vm1024 = vmor %vm1022, %vm1023
    %v1025 = vsel %vm1024, %v1017, %v1021
    %v1026 = vand.u32 2147483647, %v1016
    %vm1027 = vcmp.eq.f32.partialorder %v1026, 8.507059e+37
    %v1028 = vand.u32 %v1016, 2147483648
    %v1029 = vor.u32 1.1754944e-38, %v1028
    %v1030 = vsel %vm1027, %v1029, %v1025
    %v1031 = vmul.f32 1.0, %v1030
    %v1032 = vadd.f32 %v1010, %v252
    %1034 = vrot.lane.b32.xlu0 %v1032, 64
    %v1035 = vpop.permute.xlu0 %1034
    %v1037 = vmul.f32 %v1031, %v1035
    %1039 = vrot.lane.b32.xlu0 %v1037, 64
    %v1040 = vpop.permute.xlu0 %1039
    %v1042 = vadd.f32 %v119, %v1040
    %v1043 = vtanh.pop %v1042
    %v1044 = vsub.f32 1.0, %v1031
    %1046 = vrot.lane.b32.xlu0 %v1043, 96
    %v1047 = vpop.permute.xlu0 %1046
    %v1049 = vmul.f32 %v1044, %v1047
    %1050 = vrot.lane.b32.xlu0 %v915, 32
    %v1051 = vpop.permute.xlu0 %1050
    %v1053 = vmul.f32 %v1031, %v1051
    %v1054 = vadd.f32 %v1049, %v1053
    %v1056 = vrot.slane %v988, 4
    %1057 = vrot.lane.b32.xlu0 %v1056, 96
    %v1058 = vpop.permute.xlu0 %1057
    %v1061 = vsel %vm602, %v1058, %v920
    %v1062 = vsel %vm596, %v1054, %v1051
    %v1063 = vsel %vm602, %v1058, 0.0
    %v1064 = vsel %vm596, %v1054, 0.0
    %v1066 = vsel %vm137, %v1061, 0
    %1068 = vmatpush.msra.mxu0 0.0
    %1069 = vmatpush.msra.mxu0 0.0
    %1070 = vmatpush.msra.mxu0 0.0
    %1071 = vmatpush.msra.mxu0 0.0
    %1072 = vmatpush.msra.mxu0 0.0
    %1073 = vmatpush.msra.mxu0 0.0
    %1074 = vmatpush.msra.mxu0 0.0
    %1075 = vmatpush.msra.mxu0 0.0
    %1076 = vmatpush.msra.mxu0 0.0
    %1077 = vmatpush.msra.mxu0 0.0
    %1078 = vmatpush.msra.mxu0 0.0
    %1079 = vmatpush.msra.mxu0 0.0
    %1080 = vmatpush.msra.mxu0 %v130
    %1081 = vmatpush.msra.mxu0 %v129
    %1082 = vmatpush.msra.mxu0 %v128
    %1083 = vmatpush.msra.mxu0 %v127
    %1084 = vmatmul.f32.gmra.mxu0 %v1066
    %v1085 = vpop.f32.mrf.mxu0
    %v1086 = vadd.f32 0.0, %v1085
    %1087 = vdwg.mxu0
    %v1088 = vadd.f32 %v90, %v1086
    %v1089 = vxor.u32 %v1088, 2147483648
    %v1090 = vmul.f32 %v1089, 1.442695
    %v1091 = vpow.pop %v1090
    %v1092 = vadd.f32 %v1091, 1.0
    %v1093 = vrcp.pop %v1092
    %v1094 = vmul.f32 %v1092, %v1093
    %v1095 = vsub.f32 1.0, %v1094
    %v1096 = vmul.f32 %v1093, %v1095
    %v1097 = vadd.f32 %v1093, %v1096
    %vm1098 = vweird.f32 %v1092
    %vm1099 = vweird.f32 %v1093
    %vm1100 = vmor %vm1098, %vm1099
    %v1101 = vsel %vm1100, %v1093, %v1097
    %v1102 = vand.u32 2147483647, %v1092
    %vm1103 = vcmp.eq.f32.partialorder %v1102, 8.507059e+37
    %v1104 = vand.u32 %v1092, 2147483648
    %v1105 = vor.u32 1.1754944e-38, %v1104
    %v1106 = vsel %vm1103, %v1105, %v1101
    %v1107 = vmul.f32 1.0, %v1106
    %v1108 = vadd.f32 %v1086, %v184
    %1110 = vrot.lane.b32.xlu0 %v1108, 64
    %v1111 = vpop.permute.xlu0 %1110
    %v1113 = vmul.f32 %v1107, %v1111
    %1115 = vrot.lane.b32.xlu0 %v1113, 64
    %v1116 = vpop.permute.xlu0 %1115
    %v1118 = vadd.f32 %v90, %v1116
    %v1119 = vtanh.pop %v1118
    %v1120 = vsub.f32 1.0, %v1107
    %1122 = vrot.lane.b32.xlu0 %v1119, 96
    %v1123 = vpop.permute.xlu0 %1122
    %v1125 = vmul.f32 %v1120, %v1123
    %1126 = vrot.lane.b32.xlu0 %v1061, 32
    %v1127 = vpop.permute.xlu0 %1126
    %v1129 = vmul.f32 %v1107, %v1127
    %v1130 = vadd.f32 %v1125, %v1129
    %1132 = vrot.lane.b32.xlu0 %v1062, 96
    %v1133 = vpop.permute.xlu0 %1132
    %v1134 = vsel %vm137, %v1133, 0
    %1136 = vmatpush.msra.mxu0 0.0
    %1137 = vmatpush.msra.mxu0 0.0
    %1138 = vmatpush.msra.mxu0 0.0
    %1139 = vmatpush.msra.mxu0 0.0
    %1140 = vmatpush.msra.mxu0 0.0
    %1141 = vmatpush.msra.mxu0 0.0
    %1142 = vmatpush.msra.mxu0 0.0
    %1143 = vmatpush.msra.mxu0 0.0
    %1144 = vmatpush.msra.mxu0 0.0
    %1145 = vmatpush.msra.mxu0 0.0
    %1146 = vmatpush.msra.mxu0 0.0
    %1147 = vmatpush.msra.mxu0 0.0
    %1148 = vmatpush.msra.mxu0 %v134
    %1149 = vmatpush.msra.mxu0 %v133
    %1150 = vmatpush.msra.mxu0 %v132
    %1151 = vmatpush.msra.mxu0 %v131
    %1152 = vmatmul.f32.gmra.mxu0 %v1134
    %v1153 = vpop.f32.mrf.mxu0
    %v1154 = vadd.f32 0.0, %v1153
    %1155 = vdwg.mxu0
    %v1157 = vrot.slane %v1154, 4
    %v1159 = vadd.f32 %v116, %v1157
    %v1160 = vxor.u32 %v1159, 2147483648
    %v1161 = vmul.f32 %v1160, 1.442695
    %v1162 = vpow.pop %v1161
    %v1163 = vadd.f32 %v1162, 1.0
    %v1164 = vrcp.pop %v1163
    %v1165 = vmul.f32 %v1163, %v1164
    %v1166 = vsub.f32 1.0, %v1165
    %v1167 = vmul.f32 %v1164, %v1166
    %v1168 = vadd.f32 %v1164, %v1167
    %vm1169 = vweird.f32 %v1163
    %vm1170 = vweird.f32 %v1164
    %vm1171 = vmor %vm1169, %vm1170
    %v1172 = vsel %vm1171, %v1164, %v1168
    %v1173 = vand.u32 2147483647, %v1163
    %vm1174 = vcmp.eq.f32.partialorder %v1173, 8.507059e+37
    %v1175 = vand.u32 %v1163, 2147483648
    %v1176 = vor.u32 1.1754944e-38, %v1175
    %v1177 = vsel %vm1174, %v1176, %v1172
    %v1178 = vmul.f32 1.0, %v1177
    %v1179 = vadd.f32 %v1154, %v252
    %v1181 = vrot.slane %v1179, 4
    %1182 = vrot.lane.b32.xlu0 %v1181, 64
    %v1183 = vpop.permute.xlu0 %1182
    %v1185 = vmul.f32 %v1178, %v1183
    %1187 = vrot.lane.b32.xlu0 %v1185, 64
    %v1188 = vpop.permute.xlu0 %1187
    %v1190 = vadd.f32 %v116, %v1188
    %v1191 = vtanh.pop %v1190
    %v1192 = vsub.f32 1.0, %v1178
    %1194 = vrot.lane.b32.xlu0 %v1191, 96
    %v1195 = vpop.permute.xlu0 %1194
    %v1197 = vmul.f32 %v1192, %v1195
    %v1198 = vrot.slane %v1062, 4
    %v1200 = vmul.f32 %v1178, %v1198
    %v1201 = vadd.f32 %v1197, %v1200
    %v1202 = vsel %vm449, %v1130, %v1127
    %v1204 = vrot.slane %v1201, 4
    %1205 = vrot.lane.b32.xlu0 %v1204, 96
    %v1206 = vpop.permute.xlu0 %1205
    %v1209 = vsel %vm437, %v1206, %v1133
    %v1210 = vsel %vm449, %v1130, 0.0
    %v1211 = vsel %vm437, %v1206, 0.0
    %1213 = vrot.lane.b32.xlu0 %v1202, 96
    %v1214 = vpop.permute.xlu0 %1213
    %v1215 = vsel %vm137, %v1214, 0
    %1217 = vmatpush.msra.mxu0 0.0
    %1218 = vmatpush.msra.mxu0 0.0
    %1219 = vmatpush.msra.mxu0 0.0
    %1220 = vmatpush.msra.mxu0 0.0
    %1221 = vmatpush.msra.mxu0 0.0
    %1222 = vmatpush.msra.mxu0 0.0
    %1223 = vmatpush.msra.mxu0 0.0
    %1224 = vmatpush.msra.mxu0 0.0
    %1225 = vmatpush.msra.mxu0 0.0
    %1226 = vmatpush.msra.mxu0 0.0
    %1227 = vmatpush.msra.mxu0 0.0
    %1228 = vmatpush.msra.mxu0 0.0
    %1229 = vmatpush.msra.mxu0 %v130
    %1230 = vmatpush.msra.mxu0 %v129
    %1231 = vmatpush.msra.mxu0 %v128
    %1232 = vmatpush.msra.mxu0 %v127
    %1233 = vmatmul.f32.gmra.mxu0 %v1215
    %v1234 = vpop.f32.mrf.mxu0
    %v1235 = vadd.f32 0.0, %v1234
    %1236 = vdwg.mxu0
    %v1238 = vrot.slane %v1235, 4
    %v1240 = vadd.f32 %v90, %v1238
    %v1241 = vxor.u32 %v1240, 2147483648
    %v1242 = vmul.f32 %v1241, 1.442695
    %v1243 = vpow.pop %v1242
    %v1244 = vadd.f32 %v1243, 1.0
    %v1245 = vrcp.pop %v1244
    %v1246 = vmul.f32 %v1244, %v1245
    %v1247 = vsub.f32 1.0, %v1246
    %v1248 = vmul.f32 %v1245, %v1247
    %v1249 = vadd.f32 %v1245, %v1248
    %vm1250 = vweird.f32 %v1244
    %vm1251 = vweird.f32 %v1245
    %vm1252 = vmor %vm1250, %vm1251
    %v1253 = vsel %vm1252, %v1245, %v1249
    %v1254 = vand.u32 2147483647, %v1244
    %vm1255 = vcmp.eq.f32.partialorder %v1254, 8.507059e+37
    %v1256 = vand.u32 %v1244, 2147483648
    %v1257 = vor.u32 1.1754944e-38, %v1256
    %v1258 = vsel %vm1255, %v1257, %v1253
    %v1259 = vmul.f32 1.0, %v1258
    %v1260 = vadd.f32 %v1235, %v184
    %v1262 = vrot.slane %v1260, 4
    %1263 = vrot.lane.b32.xlu0 %v1262, 64
    %v1264 = vpop.permute.xlu0 %1263
    %v1266 = vmul.f32 %v1259, %v1264
    %1268 = vrot.lane.b32.xlu0 %v1266, 64
    %v1269 = vpop.permute.xlu0 %1268
    %v1271 = vadd.f32 %v90, %v1269
    %v1272 = vtanh.pop %v1271
    %v1273 = vsub.f32 1.0, %v1259
    %1275 = vrot.lane.b32.xlu0 %v1272, 96
    %v1276 = vpop.permute.xlu0 %1275
    %v1278 = vmul.f32 %v1273, %v1276
    %v1279 = vrot.slane %v1202, 4
    %v1281 = vmul.f32 %v1259, %v1279
    %v1282 = vadd.f32 %v1278, %v1281
    %v1284 = vsel %vm137, %v1209, 0
    %1286 = vmatpush.msra.mxu0 0.0
    %1287 = vmatpush.msra.mxu0 0.0
    %1288 = vmatpush.msra.mxu0 0.0
    %1289 = vmatpush.msra.mxu0 0.0
    %1290 = vmatpush.msra.mxu0 0.0
    %1291 = vmatpush.msra.mxu0 0.0
    %1292 = vmatpush.msra.mxu0 0.0
    %1293 = vmatpush.msra.mxu0 0.0
    %1294 = vmatpush.msra.mxu0 0.0
    %1295 = vmatpush.msra.mxu0 0.0
    %1296 = vmatpush.msra.mxu0 0.0
    %1297 = vmatpush.msra.mxu0 0.0
    %1298 = vmatpush.msra.mxu0 %v134
    %1299 = vmatpush.msra.mxu0 %v133
    %1300 = vmatpush.msra.mxu0 %v132
    %1301 = vmatpush.msra.mxu0 %v131
    %1302 = vmatmul.f32.gmra.mxu0 %v1284
    %v1303 = vpop.f32.mrf.mxu0
    %v1304 = vadd.f32 0.0, %v1303
    %1305 = vdwg.mxu0
    %v1306 = vadd.f32 %v116, %v1304
    %v1307 = vxor.u32 %v1306, 2147483648
    %v1308 = vmul.f32 %v1307, 1.442695
    %v1309 = vpow.pop %v1308
    %v1310 = vadd.f32 %v1309, 1.0
    %v1311 = vrcp.pop %v1310
    %v1312 = vmul.f32 %v1310, %v1311
    %v1313 = vsub.f32 1.0, %v1312
    %v1314 = vmul.f32 %v1311, %v1313
    %v1315 = vadd.f32 %v1311, %v1314
    %vm1316 = vweird.f32 %v1310
    %vm1317 = vweird.f32 %v1311
    %vm1318 = vmor %vm1316, %vm1317
    %v1319 = vsel %vm1318, %v1311, %v1315
    %v1320 = vand.u32 2147483647, %v1310
    %vm1321 = vcmp.eq.f32.partialorder %v1320, 8.507059e+37
    %v1322 = vand.u32 %v1310, 2147483648
    %v1323 = vor.u32 1.1754944e-38, %v1322
    %v1324 = vsel %vm1321, %v1323, %v1319
    %v1325 = vmul.f32 1.0, %v1324
    %v1326 = vadd.f32 %v1304, %v252
    %1328 = vrot.lane.b32.xlu0 %v1326, 64
    %v1329 = vpop.permute.xlu0 %1328
    %v1331 = vmul.f32 %v1325, %v1329
    %1333 = vrot.lane.b32.xlu0 %v1331, 64
    %v1334 = vpop.permute.xlu0 %1333
    %v1336 = vadd.f32 %v116, %v1334
    %v1337 = vtanh.pop %v1336
    %v1338 = vsub.f32 1.0, %v1325
    %1340 = vrot.lane.b32.xlu0 %v1337, 96
    %v1341 = vpop.permute.xlu0 %1340
    %v1343 = vmul.f32 %v1338, %v1341
    %1344 = vrot.lane.b32.xlu0 %v1209, 32
    %v1345 = vpop.permute.xlu0 %1344
    %v1347 = vmul.f32 %v1325, %v1345
    %v1348 = vadd.f32 %v1343, %v1347
    %v1350 = vrot.slane %v1282, 4
    %1351 = vrot.lane.b32.xlu0 %v1350, 96
    %v1352 = vpop.permute.xlu0 %1351
    %v1355 = vsel %vm287, %v1352, %v1214
    %v1356 = vsel %vm281, %v1348, %v1345
    %v1357 = vsel %vm287, %v1352, 0.0
    %v1358 = vsel %vm281, %v1348, 0.0
    %v1359 = vadd.f32 %v282, %v1358
    %1361 = vrot.lane.b32.xlu0 %v1359, 96
    %v1362 = vpop.permute.xlu0 %1361
    %vm1364 = vcmask 257024
    %1365 = vst.msk [vmem:[#allocation2] sm:$0xf] %vm1364, %v1362
    %v1366 = vadd.f32 %v451, %v1211
    %s1367 = scalar_lea.vmem [#allocation2], 4
    %1368 = vst.msk [vmem:[%s1367] sm:$0xf] %vm1364, %v1366
    %v1369 = vadd.f32 %v610, %v1064
    %1371 = vrot.lane.b32.xlu0 %v1369, 96
    %v1372 = vpop.permute.xlu0 %1371
    %s1374 = scalar_lea.vmem [#allocation2], 8
    %1375 = vst.msk [vmem:[%s1374] sm:$0xf] %vm1364, %v1372
    %v1376 = vadd.f32 %v769, %v917
    %s1377 = scalar_lea.vmem [#allocation2], 12
    %1378 = vst.msk [vmem:[%s1377] sm:$0xf] %vm1364, %v1376
    %v1379 = vadd.f32 %v916, %v770
    %1381 = vrot.lane.b32.xlu0 %v1379, 96
    %v1382 = vpop.permute.xlu0 %1381
    %s1384 = scalar_lea.vmem [#allocation2], 16
    %1385 = vst.msk [vmem:[%s1384] sm:$0xf] %vm1364, %v1382
    %v1386 = vadd.f32 %v1063, %v611
    %s1387 = scalar_lea.vmem [#allocation2], 20
    %1388 = vst.msk [vmem:[%s1387] sm:$0xf] %vm1364, %v1386
    %v1389 = vadd.f32 %v1210, %v452
    %1391 = vrot.lane.b32.xlu0 %v1389, 96
    %v1392 = vpop.permute.xlu0 %1391
    %s1394 = scalar_lea.vmem [#allocation2], 24
    %1395 = vst.msk [vmem:[%s1394] sm:$0xf] %vm1364, %v1392
    %v1396 = vadd.f32 %v1357, %v293
    %s1397 = scalar_lea.vmem [#allocation2], 28
    %1398 = vst.msk [vmem:[%s1397] sm:$0xf] %vm1364, %v1396
    %1399 = vst.msk [vmem:[#allocation4] sm:$0xf] %vm1364, %v1355
    %1401 = vrot.lane.b32.xlu0 %v1356, 96
    %v1402 = vpop.permute.xlu0 %1401
    %s1404 = scalar_lea.vmem [#allocation4], 4
    %1405 = vst.msk [vmem:[%s1404] sm:$0xf] %vm1364, %v1402
    // Predicated region
    $region42: #{encoder_forward.1} parent=1 // pred_check
      _
    $region43: #{encoder_forward.1} parent=1 // pred_check_branch
      %1407 = sbr.rel (0) target = $region45
    $region44: #{encoder_forward.1} parent=1 // pred_region
      %1409 = vsyncadd [#allocation3], 0
      %s1410 = sshll.u32 [#allocation2], 4
      %s1411 = int_to_ptr.vmem [resolvable:$true] %s1410
      %s1412 = sshll.u32 %s10, 4
      %s1413 = int_to_ptr.hbm [resolvable:$true] %s1412
      %1418 = dma.vmem_to_hbm [thread:$0]  %s1411, 512, %s1413, [#allocation3], 64, 64, 4
    $region45: #{encoder_forward.1} parent=1 // pred_fallthru
      _
    // Predicated region
    $region46: #{encoder_forward.1} parent=1 // pred_check
      _
    $region47: #{encoder_forward.1} parent=1 // pred_check_branch
      %1420 = sbr.rel (0) target = $region49
    $region48: #{encoder_forward.1} parent=1 // pred_region
      %1422 = vsyncadd [#allocation5], 0
      %s1423 = sshll.u32 [#allocation4], 4
      %s1424 = int_to_ptr.vmem [resolvable:$true] %s1423
      %s1425 = sshll.u32 %s11, 4
      %s1426 = int_to_ptr.hbm [resolvable:$true] %s1425
      %1431 = dma.vmem_to_hbm [thread:$0]  %s1424, 128, %s1426, [#allocation5], 64, 64, 4
    $region49: #{encoder_forward.1} parent=1 // pred_fallthru
      _
    // Predicated region
    $region50: #{encoder_forward.1} parent=1 // pred_check
      _
    $region51: #{encoder_forward.1} parent=1 // pred_check_branch
      %1433 = sbr.rel (0) target = $region53
    $region52: #{encoder_forward.1} parent=1 // pred_region
      %1435 = dma.done [#allocation3], 512
    $region53: #{encoder_forward.1} parent=1 // pred_fallthru
      _
    // Predicated region
    $region54: #{encoder_forward.1} parent=1 // pred_check
      _
    $region55: #{encoder_forward.1} parent=1 // pred_check_branch
      %1437 = sbr.rel (0) target = $region57
    $region56: #{encoder_forward.1} parent=1 // pred_region
      %1439 = dma.done [#allocation5], 128
    $region57: #{encoder_forward.1} parent=1 // pred_fallthru
      _
    %1440 = vsyncpa [#allocation3], 1
    %1441 = vsyncpa [#allocation5], 1

</llo_original>
